<compile_context>
chip_gen: v5e
topology: v5e:2x2
jax: 0.10.0
libtpu: 0.0.40
codegen_flags: <defaults>
</compile_context>

<pallas_src>
import jax
import jax.numpy as jnp
from jax.experimental import pallas as pl
from jax.experimental.pallas import tpu as pltpu


def _mlp_kernel(x_ref, w1_ref, b1_ref, w2_ref, b2_ref,
                w3_ref, b3_ref, w4_ref, b4_ref, o_ref):
    # Entire MLP for one batch tile, fully fused in VMEM.
    x = x_ref[...]                                    # bf16 (tile, F)

    h = jnp.dot(x, w1_ref[...], preferred_element_type=jnp.float32) + b1_ref[...]
    h = jnp.maximum(h, 0.0).astype(jnp.bfloat16)

    h = jnp.dot(h, w2_ref[...], preferred_element_type=jnp.float32) + b2_ref[...]
    h = jnp.maximum(h, 0.0).astype(jnp.bfloat16)

    h = jnp.dot(h, w3_ref[...], preferred_element_type=jnp.float32) + b3_ref[...]
    h = jnp.maximum(h, 0.0).astype(jnp.bfloat16)

    logits = jnp.dot(h, w4_ref[...], preferred_element_type=jnp.float32) + b4_ref[...]

    # numerically stable softmax over classes (last axis), all in f32
    m = jnp.max(logits, axis=-1, keepdims=True)
    e = jnp.exp(logits - m)
    denom = jnp.sum(e, axis=-1, keepdims=True)
    o_ref[...] = (e * pl.reciprocal(denom, approx=True)).astype(o_ref.dtype)


def _round_up(n, m):
    return ((n + m - 1) // m) * m


def _make_call(Bp, F, tile, param_shapes, single_buffer_weights):
    """Build the pallas_call for a padded batch of Bp rows, tile rows/step."""

    def const_spec(shape):
        kwargs = {}
        if single_buffer_weights:
            # grid-invariant operands: no need to double-buffer them in VMEM
            kwargs["pipeline_mode"] = pl.Buffered(1)
        return pl.BlockSpec(shape, lambda i, _s=shape: (0,) * len(_s), **kwargs)

    in_specs = [pl.BlockSpec((tile, F), lambda i: (i, 0))]
    in_specs += [const_spec(s) for s in param_shapes]

    return pl.pallas_call(
        _mlp_kernel,
        out_shape=jax.ShapeDtypeStruct((Bp, 10), jnp.float32),
        grid=(Bp // tile,),
        in_specs=in_specs,
        out_specs=pl.BlockSpec((tile, 10), lambda i: (i, 0)),
        compiler_params=pltpu.CompilerParams(
            dimension_semantics=("parallel",),
            vmem_limit_bytes=48 * 1024 * 1024,
        ),
    )


def genre_classifier_forward(x, params, *, batch_tile=256):
    """x: (B, H, W) float array. Returns (B, 10) softmax probabilities (f32)."""
    w1, b1, w2, b2, w3, b3, w4, b4 = params
    B = x.shape[0]
    F = x.shape[1] * x.shape[2]

    # wrapper glue matching torch: flatten (B,H,W) -> (B, H*W).
    # bf16 is the native MXU input dtype; accumulation stays f32 in-kernel.
    x2 = jnp.reshape(x, (B, F)).astype(jnp.bfloat16)

    # pick batch tile: as large as requested, multiple of 8, and keep the
    # grid length >= 2 when possible so both v7x TensorCores are used.
    batch_tile = max(8, (batch_tile // 8) * 8)
    tile = min(batch_tile, _round_up(B, 8))
    if tile >= B and B > 8:
        tile = _round_up((B + 1) // 2, 8)
    Bp = _round_up(B, tile)
    if Bp != B:
        x2 = jnp.pad(x2, ((0, Bp - B), (0, 0)))

    # bf16 weights (MXU-native); biases stay f32 for the f32 epilogue math.
    wb = (w1.astype(jnp.bfloat16), b1.astype(jnp.float32),
          w2.astype(jnp.bfloat16), b2.astype(jnp.float32),
          w3.astype(jnp.bfloat16), b3.astype(jnp.float32),
          w4.astype(jnp.bfloat16), b4.astype(jnp.float32))
    param_shapes = tuple(p.shape for p in wb)

    # NOTE: for very large F (>~16K) on v7x's 64 MiB VMEM, layer 1 should get
    # a K-reduction grid axis over F; unnecessary at these sizes.
    try:
        out = _make_call(Bp, F, tile, param_shapes, True)(x2, *wb)
    except Exception:
        # installed JAX may not accept pipeline_mode on BlockSpec; fall back
        # to default (double-buffered) constant operands.
        out = _make_call(Bp, F, tile, param_shapes, False)(x2, *wb)
    return out[:B]


def init_params(input_shape, key):
    """Deterministic init matching the torch layer shapes.
    Weights stored (in, out); biases stored (1, out) for in-kernel broadcast."""
    dims = [(input_shape, 512), (512, 256), (256, 64), (64, 10)]
    params = []
    for fan_in, fan_out in dims:
        kw, kb, key = jax.random.split(key, 3)
        bound = 1.0 / (fan_in ** 0.5)  # torch.nn.Linear default uniform bound
        w = jax.random.uniform(kw, (fan_in, fan_out), jnp.float32, -bound, bound)
        b = jax.random.uniform(kb, (1, fan_out), jnp.float32, -bound, bound)
        params += [w, b]
    return tuple(params)


def _reference_forward(x, params):
    """Pure-JAX f32 reference (matches the torch forward)."""
    w1, b1, w2, b2, w3, b3, w4, b4 = params
    B = x.shape[0]
    h = jnp.reshape(x, (B, -1)).astype(jnp.float32)
    h = jnp.maximum(h @ w1 + b1, 0.0)
    h = jnp.maximum(h @ w2 + b2, 0.0)
    h = jnp.maximum(h @ w3 + b3, 0.0)
    return jax.nn.softmax(h @ w4 + b4, axis=-1)


if __name__ == "__main__":
    key = jax.random.PRNGKey(0)
    k_x, k_p = jax.random.split(key)

    # small example consistent with forward(): x is (batch, H, W); F = H*W
    B, H, W = 8, 16, 8
    input_shape = H * W  # 128

    x = jax.random.normal(k_x, (B, H, W), dtype=jnp.float32)
    params = init_params(input_shape, k_p)

    out = genre_classifier_forward(x, params)
    out = jax.block_until_ready(out)

    # sanity: shape, rows are probability distributions, close to f32 reference
    assert out.shape == (B, 10)
    row_sums = jnp.sum(out, axis=1)
    assert bool(jnp.all(jnp.abs(row_sums - 1.0) < 5e-3))
    ref = _reference_forward(x, params)
    assert bool(jnp.max(jnp.abs(out - ref)) < 5e-2)  # bf16 matmul + approx recip

    print("KERNEL_OK")
</pallas_src>

<mosaic_0001>
module attributes {stable_mosaic.version = 11 : i64} {
  func.func @_mlp_kernel(%arg0: i32, %arg1: memref<8x128xbf16, #tpu.memory_space<vmem>>, %arg2: memref<128x512xbf16, #tpu.memory_space<vmem>>, %arg3: memref<1x512xf32, #tpu.memory_space<vmem>>, %arg4: memref<512x256xbf16, #tpu.memory_space<vmem>>, %arg5: memref<1x256xf32, #tpu.memory_space<vmem>>, %arg6: memref<256x64xbf16, #tpu.memory_space<vmem>>, %arg7: memref<1x64xf32, #tpu.memory_space<vmem>>, %arg8: memref<64x10xbf16, #tpu.memory_space<vmem>>, %arg9: memref<1x10xf32, #tpu.memory_space<vmem>>, %arg10: memref<8x10xf32, #tpu.memory_space<vmem>>) attributes {dimension_semantics = [#tpu.dimension_semantics<parallel>], iteration_bounds = array<i64: 1>, scalar_prefetch = 0 : i64, scratch_operands = 0 : i64, tpu.core_type = #tpu.core_type<tc>, window_params = [{transform_indices = @transform_0, window_bounds = array<i64: 8, 128>}, {pipeline_mode = #tpu.pipeline_mode<synchronous>, transform_indices = @transform_1, window_bounds = array<i64: 128, 512>}, {pipeline_mode = #tpu.pipeline_mode<synchronous>, transform_indices = @transform_2, window_bounds = array<i64: 1, 512>}, {pipeline_mode = #tpu.pipeline_mode<synchronous>, transform_indices = @transform_3, window_bounds = array<i64: 512, 256>}, {pipeline_mode = #tpu.pipeline_mode<synchronous>, transform_indices = @transform_4, window_bounds = array<i64: 1, 256>}, {pipeline_mode = #tpu.pipeline_mode<synchronous>, transform_indices = @transform_5, window_bounds = array<i64: 256, 64>}, {pipeline_mode = #tpu.pipeline_mode<synchronous>, transform_indices = @transform_6, window_bounds = array<i64: 1, 64>}, {pipeline_mode = #tpu.pipeline_mode<synchronous>, transform_indices = @transform_7, window_bounds = array<i64: 64, 10>}, {pipeline_mode = #tpu.pipeline_mode<synchronous>, transform_indices = @transform_8, window_bounds = array<i64: 1, 10>}, {transform_indices = @transform_9, window_bounds = array<i64: 8, 10>}]} {
    %c0 = arith.constant 0 : index
    %c0_0 = arith.constant 0 : index
    %0 = vector.load %arg1[%c0, %c0_0] : memref<8x128xbf16, #tpu.memory_space<vmem>>, vector<8x128xbf16>
    %c0_1 = arith.constant 0 : index
    %c0_2 = arith.constant 0 : index
    %1 = vector.load %arg2[%c0_1, %c0_2] : memref<128x512xbf16, #tpu.memory_space<vmem>>, vector<128x512xbf16>
    %cst = arith.constant dense<0.000000e+00> : vector<8x512xf32>
    %2 = tpu.matmul %0, %1, %cst {dimension_numbers = #tpu.dot_dimension_numbers<[1], [0], [0], [1], [0, 0, 1, 1], [], []>} : vector<8x128xbf16>, vector<128x512xbf16>, vector<8x512xf32> -> vector<8x512xf32>
    %c0_3 = arith.constant 0 : index
    %c0_4 = arith.constant 0 : index
    %3 = vector.load %arg3[%c0_3, %c0_4] : memref<1x512xf32, #tpu.memory_space<vmem>>, vector<1x512xf32>
    %4 = vector.broadcast %3 : vector<1x512xf32> to vector<8x512xf32>
    %5 = arith.addf %2, %4 : vector<8x512xf32>
    %cst_5 = arith.constant 0.000000e+00 : f32
    %6 = vector.broadcast %cst_5 : f32 to vector<8x512xf32>
    %7 = arith.maximumf %5, %6 : vector<8x512xf32>
    %8 = arith.truncf %7 : vector<8x512xf32> to vector<8x512xbf16>
    %c0_6 = arith.constant 0 : index
    %c0_7 = arith.constant 0 : index
    %9 = vector.load %arg4[%c0_6, %c0_7] : memref<512x256xbf16, #tpu.memory_space<vmem>>, vector<512x256xbf16>
    %cst_8 = arith.constant dense<0.000000e+00> : vector<8x256xf32>
    %10 = tpu.matmul %8, %9, %cst_8 {dimension_numbers = #tpu.dot_dimension_numbers<[1], [0], [0], [1], [0, 0, 1, 1], [], []>} : vector<8x512xbf16>, vector<512x256xbf16>, vector<8x256xf32> -> vector<8x256xf32>
    %c0_9 = arith.constant 0 : index
    %c0_10 = arith.constant 0 : index
    %11 = vector.load %arg5[%c0_9, %c0_10] : memref<1x256xf32, #tpu.memory_space<vmem>>, vector<1x256xf32>
    %12 = vector.broadcast %11 : vector<1x256xf32> to vector<8x256xf32>
    %13 = arith.addf %10, %12 : vector<8x256xf32>
    %cst_11 = arith.constant 0.000000e+00 : f32
    %14 = vector.broadcast %cst_11 : f32 to vector<8x256xf32>
    %15 = arith.maximumf %13, %14 : vector<8x256xf32>
    %16 = arith.truncf %15 : vector<8x256xf32> to vector<8x256xbf16>
    %c0_12 = arith.constant 0 : index
    %c0_13 = arith.constant 0 : index
    %17 = vector.load %arg6[%c0_12, %c0_13] : memref<256x64xbf16, #tpu.memory_space<vmem>>, vector<256x64xbf16>
    %cst_14 = arith.constant dense<0.000000e+00> : vector<8x64xf32>
    %18 = tpu.matmul %16, %17, %cst_14 {dimension_numbers = #tpu.dot_dimension_numbers<[1], [0], [0], [1], [0, 0, 1, 1], [], []>} : vector<8x256xbf16>, vector<256x64xbf16>, vector<8x64xf32> -> vector<8x64xf32>
    %c0_15 = arith.constant 0 : index
    %c0_16 = arith.constant 0 : index
    %19 = vector.load %arg7[%c0_15, %c0_16] : memref<1x64xf32, #tpu.memory_space<vmem>>, vector<1x64xf32>
    %20 = vector.broadcast %19 : vector<1x64xf32> to vector<8x64xf32>
    %21 = arith.addf %18, %20 : vector<8x64xf32>
    %cst_17 = arith.constant 0.000000e+00 : f32
    %22 = vector.broadcast %cst_17 : f32 to vector<8x64xf32>
    %23 = arith.maximumf %21, %22 : vector<8x64xf32>
    %24 = arith.truncf %23 : vector<8x64xf32> to vector<8x64xbf16>
    %c0_18 = arith.constant 0 : index
    %c0_19 = arith.constant 0 : index
    %25 = vector.load %arg8[%c0_18, %c0_19] : memref<64x10xbf16, #tpu.memory_space<vmem>>, vector<64x10xbf16>
    %cst_20 = arith.constant dense<0.000000e+00> : vector<8x10xf32>
    %26 = tpu.matmul %24, %25, %cst_20 {dimension_numbers = #tpu.dot_dimension_numbers<[1], [0], [0], [1], [0, 0, 1, 1], [], []>} : vector<8x64xbf16>, vector<64x10xbf16>, vector<8x10xf32> -> vector<8x10xf32>
    %c0_21 = arith.constant 0 : index
    %c0_22 = arith.constant 0 : index
    %27 = vector.load %arg9[%c0_21, %c0_22] : memref<1x10xf32, #tpu.memory_space<vmem>>, vector<1x10xf32>
    %28 = vector.broadcast %27 : vector<1x10xf32> to vector<8x10xf32>
    %29 = arith.addf %26, %28 : vector<8x10xf32>
    %cst_23 = arith.constant dense<0xFF800000> : vector<8xf32>
    %30 = vector.multi_reduction <maximumf>, %29, %cst_23 [1] : vector<8x10xf32> to vector<8xf32>
    %31 = vector.shape_cast %30 : vector<8xf32> to vector<8x1xf32>
    %32 = vector.broadcast %31 : vector<8x1xf32> to vector<8x10xf32>
    %33 = arith.subf %29, %32 : vector<8x10xf32>
    %34 = math.exp %33 : vector<8x10xf32>
    %cst_24 = arith.constant dense<0.000000e+00> : vector<8xf32>
    %35 = vector.multi_reduction <add>, %34, %cst_24 [1] : vector<8x10xf32> to vector<8xf32>
    %36 = vector.shape_cast %35 : vector<8xf32> to vector<8x1xf32>
    %37 = tpu.reciprocal %36 {approx = true} : vector<8x1xf32> -> vector<8x1xf32>
    %38 = vector.broadcast %37 : vector<8x1xf32> to vector<8x10xf32>
    %39 = arith.mulf %34, %38 : vector<8x10xf32>
    %c0_25 = arith.constant 0 : index
    %c0_26 = arith.constant 0 : index
    %40 = vector.load %arg10[%c0_25, %c0_26] : memref<8x10xf32, #tpu.memory_space<vmem>>, vector<8x10xf32>
    tpu.vector_store %arg10[%c0_25, %c0_26], %39 {strides = array<i32>} : memref<8x10xf32, #tpu.memory_space<vmem>>, vector<8x10xf32>,
    return
  }
  func.func @transform_0(%arg0: i32) -> (i32, i32) {
    %c0_i32 = arith.constant 0 : i32
    %c0_i32_0 = arith.constant 0 : i32
    return %arg0, %c0_i32 : i32, i32
  }
  func.func @transform_1(%arg0: i32) -> (i32, i32) {
    %c0_i32 = arith.constant 0 : i32
    %c0_i32_0 = arith.constant 0 : i32
    %c0_i32_1 = arith.constant 0 : i32
    return %c0_i32, %c0_i32_0 : i32, i32
  }
  func.func @transform_2(%arg0: i32) -> (i32, i32) {
    %c0_i32 = arith.constant 0 : i32
    %c0_i32_0 = arith.constant 0 : i32
    %c0_i32_1 = arith.constant 0 : i32
    return %c0_i32, %c0_i32_0 : i32, i32
  }
  func.func @transform_3(%arg0: i32) -> (i32, i32) {
    %c0_i32 = arith.constant 0 : i32
    %c0_i32_0 = arith.constant 0 : i32
    %c0_i32_1 = arith.constant 0 : i32
    return %c0_i32, %c0_i32_0 : i32, i32
  }
  func.func @transform_4(%arg0: i32) -> (i32, i32) {
    %c0_i32 = arith.constant 0 : i32
    %c0_i32_0 = arith.constant 0 : i32
    %c0_i32_1 = arith.constant 0 : i32
    return %c0_i32, %c0_i32_0 : i32, i32
  }
  func.func @transform_5(%arg0: i32) -> (i32, i32) {
    %c0_i32 = arith.constant 0 : i32
    %c0_i32_0 = arith.constant 0 : i32
    %c0_i32_1 = arith.constant 0 : i32
    return %c0_i32, %c0_i32_0 : i32, i32
  }
  func.func @transform_6(%arg0: i32) -> (i32, i32) {
    %c0_i32 = arith.constant 0 : i32
    %c0_i32_0 = arith.constant 0 : i32
    %c0_i32_1 = arith.constant 0 : i32
    return %c0_i32, %c0_i32_0 : i32, i32
  }
  func.func @transform_7(%arg0: i32) -> (i32, i32) {
    %c0_i32 = arith.constant 0 : i32
    %c0_i32_0 = arith.constant 0 : i32
    %c0_i32_1 = arith.constant 0 : i32
    return %c0_i32, %c0_i32_0 : i32, i32
  }
  func.func @transform_8(%arg0: i32) -> (i32, i32) {
    %c0_i32 = arith.constant 0 : i32
    %c0_i32_0 = arith.constant 0 : i32
    %c0_i32_1 = arith.constant 0 : i32
    return %c0_i32, %c0_i32_0 : i32, i32
  }
  func.func @transform_9(%arg0: i32) -> (i32, i32) {
    %c0_i32 = arith.constant 0 : i32
    %c0_i32_0 = arith.constant 0 : i32
    return %arg0, %c0_i32 : i32, i32
  }
}

module attributes {stable_mosaic.version = 11 : i64} {
  func.func @_mlp_kernel(%arg0: i32, %arg1: memref<8x128xbf16, #tpu.memory_space<vmem>>, %arg2: memref<128x512xbf16, #tpu.memory_space<vmem>>, %arg3: memref<1x512xf32, #tpu.memory_space<vmem>>, %arg4: memref<512x256xbf16, #tpu.memory_space<vmem>>, %arg5: memref<1x256xf32, #tpu.memory_space<vmem>>, %arg6: memref<256x64xbf16, #tpu.memory_space<vmem>>, %arg7: memref<1x64xf32, #tpu.memory_space<vmem>>, %arg8: memref<64x10xbf16, #tpu.memory_space<vmem>>, %arg9: memref<1x10xf32, #tpu.memory_space<vmem>>, %arg10: memref<8x10xf32, #tpu.memory_space<vmem>>) attributes {dimension_semantics = [#tpu.dimension_semantics<parallel>], iteration_bounds = array<i64: 1>, scalar_prefetch = 0 : i64, scratch_operands = 0 : i64, tpu.core_type = #tpu.core_type<tc>, window_params = [{transform_indices = @transform_0, window_bounds = array<i64: 8, 128>}, {pipeline_mode = #tpu.pipeline_mode<synchronous>, transform_indices = @transform_1, window_bounds = array<i64: 128, 512>}, {pipeline_mode = #tpu.pipeline_mode<synchronous>, transform_indices = @transform_2, window_bounds = array<i64: 1, 512>}, {pipeline_mode = #tpu.pipeline_mode<synchronous>, transform_indices = @transform_3, window_bounds = array<i64: 512, 256>}, {pipeline_mode = #tpu.pipeline_mode<synchronous>, transform_indices = @transform_4, window_bounds = array<i64: 1, 256>}, {pipeline_mode = #tpu.pipeline_mode<synchronous>, transform_indices = @transform_5, window_bounds = array<i64: 256, 64>}, {pipeline_mode = #tpu.pipeline_mode<synchronous>, transform_indices = @transform_6, window_bounds = array<i64: 1, 64>}, {pipeline_mode = #tpu.pipeline_mode<synchronous>, transform_indices = @transform_7, window_bounds = array<i64: 64, 10>}, {pipeline_mode = #tpu.pipeline_mode<synchronous>, transform_indices = @transform_8, window_bounds = array<i64: 1, 10>}, {transform_indices = @transform_9, window_bounds = array<i64: 8, 10>}]} {
    %c0 = arith.constant 0 : index
    %c0_0 = arith.constant 0 : index
    %0 = vector.load %arg1[%c0, %c0_0] : memref<8x128xbf16, #tpu.memory_space<vmem>>, vector<8x128xbf16>
    %c0_1 = arith.constant 0 : index
    %c0_2 = arith.constant 0 : index
    %1 = vector.load %arg2[%c0_1, %c0_2] : memref<128x512xbf16, #tpu.memory_space<vmem>>, vector<128x512xbf16>
    %cst = arith.constant dense<0.000000e+00> : vector<8x512xf32>
    %2 = tpu.matmul %0, %1, %cst {dimension_numbers = #tpu.dot_dimension_numbers<[1], [0], [0], [1], [0, 0, 1, 1], [], []>} : vector<8x128xbf16>, vector<128x512xbf16>, vector<8x512xf32> -> vector<8x512xf32>
    %c0_3 = arith.constant 0 : index
    %c0_4 = arith.constant 0 : index
    %3 = vector.load %arg3[%c0_3, %c0_4] : memref<1x512xf32, #tpu.memory_space<vmem>>, vector<1x512xf32>
    %4 = vector.broadcast %3 : vector<1x512xf32> to vector<8x512xf32>
    %5 = arith.addf %2, %4 : vector<8x512xf32>
    %cst_5 = arith.constant 0.000000e+00 : f32
    %6 = vector.broadcast %cst_5 : f32 to vector<8x512xf32>
    %7 = arith.maximumf %5, %6 : vector<8x512xf32>
    %8 = arith.truncf %7 : vector<8x512xf32> to vector<8x512xbf16>
    %c0_6 = arith.constant 0 : index
    %c0_7 = arith.constant 0 : index
    %9 = vector.load %arg4[%c0_6, %c0_7] : memref<512x256xbf16, #tpu.memory_space<vmem>>, vector<512x256xbf16>
    %cst_8 = arith.constant dense<0.000000e+00> : vector<8x256xf32>
    %10 = tpu.matmul %8, %9, %cst_8 {dimension_numbers = #tpu.dot_dimension_numbers<[1], [0], [0], [1], [0, 0, 1, 1], [], []>} : vector<8x512xbf16>, vector<512x256xbf16>, vector<8x256xf32> -> vector<8x256xf32>
    %c0_9 = arith.constant 0 : index
    %c0_10 = arith.constant 0 : index
    %11 = vector.load %arg5[%c0_9, %c0_10] : memref<1x256xf32, #tpu.memory_space<vmem>>, vector<1x256xf32>
    %12 = vector.broadcast %11 : vector<1x256xf32> to vector<8x256xf32>
    %13 = arith.addf %10, %12 : vector<8x256xf32>
    %cst_11 = arith.constant 0.000000e+00 : f32
    %14 = vector.broadcast %cst_11 : f32 to vector<8x256xf32>
    %15 = arith.maximumf %13, %14 : vector<8x256xf32>
    %16 = arith.truncf %15 : vector<8x256xf32> to vector<8x256xbf16>
    %c0_12 = arith.constant 0 : index
    %c0_13 = arith.constant 0 : index
    %17 = vector.load %arg6[%c0_12, %c0_13] : memref<256x64xbf16, #tpu.memory_space<vmem>>, vector<256x64xbf16>
    %cst_14 = arith.constant dense<0.000000e+00> : vector<8x64xf32>
    %18 = tpu.matmul %16, %17, %cst_14 {dimension_numbers = #tpu.dot_dimension_numbers<[1], [0], [0], [1], [0, 0, 1, 1], [], []>} : vector<8x256xbf16>, vector<256x64xbf16>, vector<8x64xf32> -> vector<8x64xf32>
    %c0_15 = arith.constant 0 : index
    %c0_16 = arith.constant 0 : index
    %19 = vector.load %arg7[%c0_15, %c0_16] : memref<1x64xf32, #tpu.memory_space<vmem>>, vector<1x64xf32>
    %20 = vector.broadcast %19 : vector<1x64xf32> to vector<8x64xf32>
    %21 = arith.addf %18, %20 : vector<8x64xf32>
    %cst_17 = arith.constant 0.000000e+00 : f32
    %22 = vector.broadcast %cst_17 : f32 to vector<8x64xf32>
    %23 = arith.maximumf %21, %22 : vector<8x64xf32>
    %24 = arith.truncf %23 : vector<8x64xf32> to vector<8x64xbf16>
    %c0_18 = arith.constant 0 : index
    %c0_19 = arith.constant 0 : index
    %25 = vector.load %arg8[%c0_18, %c0_19] : memref<64x10xbf16, #tpu.memory_space<vmem>>, vector<64x10xbf16>
    %cst_20 = arith.constant dense<0.000000e+00> : vector<8x10xf32>
    %26 = tpu.matmul %24, %25, %cst_20 {dimension_numbers = #tpu.dot_dimension_numbers<[1], [0], [0], [1], [0, 0, 1, 1], [], []>} : vector<8x64xbf16>, vector<64x10xbf16>, vector<8x10xf32> -> vector<8x10xf32>
    %c0_21 = arith.constant 0 : index
    %c0_22 = arith.constant 0 : index
    %27 = vector.load %arg9[%c0_21, %c0_22] : memref<1x10xf32, #tpu.memory_space<vmem>>, vector<1x10xf32>
    %28 = vector.broadcast %27 : vector<1x10xf32> to vector<8x10xf32>
    %29 = arith.addf %26, %28 : vector<8x10xf32>
    %cst_23 = arith.constant dense<0xFF800000> : vector<8xf32>
    %30 = vector.multi_reduction <maximumf>, %29, %cst_23 [1] : vector<8x10xf32> to vector<8xf32>
    %31 = vector.shape_cast %30 : vector<8xf32> to vector<8x1xf32>
    %32 = vector.broadcast %31 : vector<8x1xf32> to vector<8x10xf32>
    %33 = arith.subf %29, %32 : vector<8x10xf32>
    %34 = math.exp %33 : vector<8x10xf32>
    %cst_24 = arith.constant dense<0.000000e+00> : vector<8xf32>
    %35 = vector.multi_reduction <add>, %34, %cst_24 [1] : vector<8x10xf32> to vector<8xf32>
    %36 = vector.shape_cast %35 : vector<8xf32> to vector<8x1xf32>
    %37 = tpu.reciprocal %36 {approx = true} : vector<8x1xf32> -> vector<8x1xf32>
    %38 = vector.broadcast %37 : vector<8x1xf32> to vector<8x10xf32>
    %39 = arith.mulf %34, %38 : vector<8x10xf32>
    %c0_25 = arith.constant 0 : index
    %c0_26 = arith.constant 0 : index
    %40 = vector.load %arg10[%c0_25, %c0_26] : memref<8x10xf32, #tpu.memory_space<vmem>>, vector<8x10xf32>
    tpu.vector_store %arg10[%c0_25, %c0_26], %39 {strides = array<i32>} : memref<8x10xf32, #tpu.memory_space<vmem>>, vector<8x10xf32>,
    return
  }
  func.func @transform_0(%arg0: i32) -> (i32, i32) {
    %c0_i32 = arith.constant 0 : i32
    %c0_i32_0 = arith.constant 0 : i32
    return %arg0, %c0_i32 : i32, i32
  }
  func.func @transform_1(%arg0: i32) -> (i32, i32) {
    %c0_i32 = arith.constant 0 : i32
    %c0_i32_0 = arith.constant 0 : i32
    %c0_i32_1 = arith.constant 0 : i32
    return %c0_i32, %c0_i32_0 : i32, i32
  }
  func.func @transform_2(%arg0: i32) -> (i32, i32) {
    %c0_i32 = arith.constant 0 : i32
    %c0_i32_0 = arith.constant 0 : i32
    %c0_i32_1 = arith.constant 0 : i32
    return %c0_i32, %c0_i32_0 : i32, i32
  }
  func.func @transform_3(%arg0: i32) -> (i32, i32) {
    %c0_i32 = arith.constant 0 : i32
    %c0_i32_0 = arith.constant 0 : i32
    %c0_i32_1 = arith.constant 0 : i32
    return %c0_i32, %c0_i32_0 : i32, i32
  }
  func.func @transform_4(%arg0: i32) -> (i32, i32) {
    %c0_i32 = arith.constant 0 : i32
    %c0_i32_0 = arith.constant 0 : i32
    %c0_i32_1 = arith.constant 0 : i32
    return %c0_i32, %c0_i32_0 : i32, i32
  }
  func.func @transform_5(%arg0: i32) -> (i32, i32) {
    %c0_i32 = arith.constant 0 : i32
    %c0_i32_0 = arith.constant 0 : i32
    %c0_i32_1 = arith.constant 0 : i32
    return %c0_i32, %c0_i32_0 : i32, i32
  }
  func.func @transform_6(%arg0: i32) -> (i32, i32) {
    %c0_i32 = arith.constant 0 : i32
    %c0_i32_0 = arith.constant 0 : i32
    %c0_i32_1 = arith.constant 0 : i32
    return %c0_i32, %c0_i32_0 : i32, i32
  }
  func.func @transform_7(%arg0: i32) -> (i32, i32) {
    %c0_i32 = arith.constant 0 : i32
    %c0_i32_0 = arith.constant 0 : i32
    %c0_i32_1 = arith.constant 0 : i32
    return %c0_i32, %c0_i32_0 : i32, i32
  }
  func.func @transform_8(%arg0: i32) -> (i32, i32) {
    %c0_i32 = arith.constant 0 : i32
    %c0_i32_0 = arith.constant 0 : i32
    %c0_i32_1 = arith.constant 0 : i32
    return %c0_i32, %c0_i32_0 : i32, i32
  }
  func.func @transform_9(%arg0: i32) -> (i32, i32) {
    %c0_i32 = arith.constant 0 : i32
    %c0_i32_0 = arith.constant 0 : i32
    return %arg0, %c0_i32 : i32, i32
  }
}

</mosaic_0001>

<llo_original>
// kernel: tpu_custom_call.1
$region0: #{tpu_custom_call.1}
  #allocation0 [shape = 'u32[]', space=smem, size = 0x4, offset = 0x4, fixed_abs, tag = 'smem constant byte address 0x4 - core index']
  #allocation1 [shape = 'u32[72,128]{1,0:T(1,128)}', space=vmem, size = 0x9000, scoped, tag = 'internal scratch']
  %s0 = inlined_call_operand.vmem [shape: bf16[8,128], index: 0, kind: input, shape index: {}]
  %s1 = inlined_call_operand.hbm [shape: bf16[128,512], index: 1, kind: input, shape index: {}]
  %s2 = inlined_call_operand.vmem [shape: f32[1,512], index: 2, kind: input, shape index: {}]
  %s3 = inlined_call_operand.hbm [shape: bf16[512,256], index: 3, kind: input, shape index: {}]
  %s4 = inlined_call_operand.vmem [shape: f32[1,256], index: 4, kind: input, shape index: {}]
  %s5 = inlined_call_operand.vmem [shape: bf16[256,64], index: 5, kind: input, shape index: {}]
  %s6 = inlined_call_operand.vmem [shape: f32[1,64], index: 6, kind: input, shape index: {}]
  %s7 = inlined_call_operand.vmem [shape: bf16[64,10], index: 7, kind: input, shape index: {}]
  %s8 = inlined_call_operand.vmem [shape: f32[1,10], index: 8, kind: input, shape index: {}]
  %s9 = inlined_call_operand.hbm [shape: f32[8,10], index: 9, kind: output, shape index: {}]
  %s10 = sld [smem:[#allocation0]]
  $region54: #{tpu_custom_call.1} parent=0
    _
  %s12 = ssub.s32 1, %s10
  %s13 = scalar_select 0, %s12, %s10
  $region1: #{tpu_custom_call.1} parent=0
    #allocation2 [shape = 'u8[131072]{0}', space=vmem, size = 0x20000, scoped, tag = 'input window, operand 1, single buffered']
    #allocation3 [shape = 's32[1]{0}', space=sflag, size = 0x4, scoped, tag = 'scoped memory for tpu_custom_call.1']
    #allocation4 [shape = 's32[1]{0}', space=sflag, size = 0x4, scoped, tag = 'scoped memory for tpu_custom_call.1']
    #allocation5 [shape = 'u8[262144]{0}', space=vmem, size = 0x40000, scoped, tag = 'input window, operand 3, single buffered']
    #allocation6 [shape = 's32[1]{0}', space=sflag, size = 0x4, scoped, tag = 'scoped memory for tpu_custom_call.1']
    #allocation7 [shape = 'u8[4096]{0}', space=vmem, size = 0x1000, scoped, tag = 'output window, operand 0, single buffered']
    %14 = vsyncpa [#allocation3], 0
    %15 = vsyncpa [#allocation6], 0
    %16 = vsyncpa [#allocation4], 0
    // Predicated region
    $region2: #{tpu_custom_call.1} parent=1 // pred_check
      _
    $region3: #{tpu_custom_call.1} parent=1 // pred_check_branch
      %18 = sbr.rel (0) target = $region5
    $region4: #{tpu_custom_call.1} parent=1 // pred_region
      _
    $region5: #{tpu_custom_call.1} parent=1 // pred_fallthru
      _
    // Predicated region
    $region6: #{tpu_custom_call.1} parent=1 // pred_check
      _
    $region7: #{tpu_custom_call.1} parent=1 // pred_check_branch
      %20 = sbr.rel (0) target = $region9
    $region8: #{tpu_custom_call.1} parent=1 // pred_region
      %22 = vsyncadd [#allocation3], 0
      %s23 = sshll.u32 %s1, 4
      %s24 = int_to_ptr.hbm [resolvable:$true] %s23
      %s25 = sshll.u32 [#allocation2], 4
      %s26 = int_to_ptr.vmem [resolvable:$true] %s25
      %31 = dma.hbm_to_vmem [thread:$0]  %s24, 4096, %s26, [#allocation3], 256, 256, 16
    $region9: #{tpu_custom_call.1} parent=1 // pred_fallthru
      _
    // Predicated region
    $region10: #{tpu_custom_call.1} parent=1 // pred_check
      _
    $region11: #{tpu_custom_call.1} parent=1 // pred_check_branch
      %33 = sbr.rel (0) target = $region13
    $region12: #{tpu_custom_call.1} parent=1 // pred_region
      _
    $region13: #{tpu_custom_call.1} parent=1 // pred_fallthru
      _
    // Predicated region
    $region14: #{tpu_custom_call.1} parent=1 // pred_check
      _
    $region15: #{tpu_custom_call.1} parent=1 // pred_check_branch
      %35 = sbr.rel (0) target = $region17
    $region16: #{tpu_custom_call.1} parent=1 // pred_region
      %37 = vsyncadd [#allocation6], 0
      %s38 = sshll.u32 %s3, 4
      %s39 = int_to_ptr.hbm [resolvable:$true] %s38
      %s40 = sshll.u32 [#allocation5], 4
      %s41 = int_to_ptr.vmem [resolvable:$true] %s40
      %46 = dma.hbm_to_vmem [thread:$0]  %s39, 8192, %s41, [#allocation6], 128, 128, 8
    $region17: #{tpu_custom_call.1} parent=1 // pred_fallthru
      _
    // Predicated region
    $region18: #{tpu_custom_call.1} parent=1 // pred_check
      _
    $region19: #{tpu_custom_call.1} parent=1 // pred_check_branch
      %48 = sbr.rel (0) target = $region21
    $region20: #{tpu_custom_call.1} parent=1 // pred_region
      _
    $region21: #{tpu_custom_call.1} parent=1 // pred_fallthru
      _
    // Predicated region
    $region22: #{tpu_custom_call.1} parent=1 // pred_check
      _
    $region23: #{tpu_custom_call.1} parent=1 // pred_check_branch
      %50 = sbr.rel (0) target = $region25
    $region24: #{tpu_custom_call.1} parent=1 // pred_region
      _
    $region25: #{tpu_custom_call.1} parent=1 // pred_fallthru
      _
    // Predicated region
    $region26: #{tpu_custom_call.1} parent=1 // pred_check
      _
    $region27: #{tpu_custom_call.1} parent=1 // pred_check_branch
      %52 = sbr.rel (0) target = $region29
    $region28: #{tpu_custom_call.1} parent=1 // pred_region
      _
    $region29: #{tpu_custom_call.1} parent=1 // pred_fallthru
      _
    // Predicated region
    $region30: #{tpu_custom_call.1} parent=1 // pred_check
      _
    $region31: #{tpu_custom_call.1} parent=1 // pred_check_branch
      %54 = sbr.rel (0) target = $region33
    $region32: #{tpu_custom_call.1} parent=1 // pred_region
      _
    $region33: #{tpu_custom_call.1} parent=1 // pred_fallthru
      _
    // Predicated region
    $region34: #{tpu_custom_call.1} parent=1 // pred_check
      _
    $region35: #{tpu_custom_call.1} parent=1 // pred_check_branch
      %56 = sbr.rel (0) target = $region37
    $region36: #{tpu_custom_call.1} parent=1 // pred_region
      _
    $region37: #{tpu_custom_call.1} parent=1 // pred_fallthru
      _
    // Predicated region
    $region38: #{tpu_custom_call.1} parent=1 // pred_check
      _
    $region39: #{tpu_custom_call.1} parent=1 // pred_check_branch
      %58 = sbr.rel (0) target = $region41
    $region40: #{tpu_custom_call.1} parent=1 // pred_region
      %60 = dma.done [#allocation3], 4096
    $region41: #{tpu_custom_call.1} parent=1 // pred_fallthru
      _
    // Predicated region
    $region42: #{tpu_custom_call.1} parent=1 // pred_check
      _
    $region43: #{tpu_custom_call.1} parent=1 // pred_check_branch
      %62 = sbr.rel (0) target = $region45
    $region44: #{tpu_custom_call.1} parent=1 // pred_region
      %64 = dma.done [#allocation6], 8192
    $region45: #{tpu_custom_call.1} parent=1 // pred_fallthru
      _
    %v66 = vld [vmem:[%s0] sm:$0xf]
    %v67 = vld [vmem:[#allocation2] sm:$0xff]
    %v68 = vld [vmem:[#allocation2 + $0x8] sm:$0xff]
    %v69 = vld [vmem:[#allocation2 + $0x10] sm:$0xff]
    %v70 = vld [vmem:[#allocation2 + $0x18] sm:$0xff]
    %v71 = vld [vmem:[#allocation2 + $0x20] sm:$0xff]
    %v72 = vld [vmem:[#allocation2 + $0x28] sm:$0xff]
    %v73 = vld [vmem:[#allocation2 + $0x30] sm:$0xff]
    %v74 = vld [vmem:[#allocation2 + $0x38] sm:$0xff]
    %v75 = vld [vmem:[#allocation2 + $0x40] sm:$0xff]
    %v76 = vld [vmem:[#allocation2 + $0x48] sm:$0xff]
    %v77 = vld [vmem:[#allocation2 + $0x50] sm:$0xff]
    %v78 = vld [vmem:[#allocation2 + $0x58] sm:$0xff]
    %v79 = vld [vmem:[#allocation2 + $0x60] sm:$0xff]
    %v80 = vld [vmem:[#allocation2 + $0x68] sm:$0xff]
    %v81 = vld [vmem:[#allocation2 + $0x70] sm:$0xff]
    %v82 = vld [vmem:[#allocation2 + $0x78] sm:$0xff]
    %v83 = vld [vmem:[#allocation2 + $0x80] sm:$0xff]
    %v84 = vld [vmem:[#allocation2 + $0x88] sm:$0xff]
    %v85 = vld [vmem:[#allocation2 + $0x90] sm:$0xff]
    %v86 = vld [vmem:[#allocation2 + $0x98] sm:$0xff]
    %v87 = vld [vmem:[#allocation2 + $0xa0] sm:$0xff]
    %v88 = vld [vmem:[#allocation2 + $0xa8] sm:$0xff]
    %v89 = vld [vmem:[#allocation2 + $0xb0] sm:$0xff]
    %v90 = vld [vmem:[#allocation2 + $0xb8] sm:$0xff]
    %v91 = vld [vmem:[#allocation2 + $0xc0] sm:$0xff]
    %v92 = vld [vmem:[#allocation2 + $0xc8] sm:$0xff]
    %v93 = vld [vmem:[#allocation2 + $0xd0] sm:$0xff]
    %v94 = vld [vmem:[#allocation2 + $0xd8] sm:$0xff]
    %v95 = vld [vmem:[#allocation2 + $0xe0] sm:$0xff]
    %v96 = vld [vmem:[#allocation2 + $0xe8] sm:$0xff]
    %v97 = vld [vmem:[#allocation2 + $0xf0] sm:$0xff]
    %v98 = vld [vmem:[#allocation2 + $0xf8] sm:$0xff]
    %v99 = vld [vmem:[%s2] sm:$0xf]
    %v101 = vperm.slane %v99, 0
    %v102 = vperm.slane %v99, 1
    %v103 = vperm.slane %v99, 2
    %v104 = vperm.slane %v99, 3
    %v141 = vunpack.c.l.b16 %v67
    %v142 = vunpack.c.h.b16 %v67
    %v143 = vunpack.c.l.b16 %v68
    %v144 = vunpack.c.h.b16 %v68
    %v145 = vunpack.c.l.b16 %v69
    %v146 = vunpack.c.h.b16 %v69
    %v147 = vunpack.c.l.b16 %v70
    %v148 = vunpack.c.h.b16 %v70
    %v149 = vunpack.c.l.b16 %v71
    %v150 = vunpack.c.h.b16 %v71
    %v151 = vunpack.c.l.b16 %v72
    %v152 = vunpack.c.h.b16 %v72
    %v153 = vunpack.c.l.b16 %v73
    %v154 = vunpack.c.h.b16 %v73
    %v155 = vunpack.c.l.b16 %v74
    %v156 = vunpack.c.h.b16 %v74
    %v157 = vunpack.c.l.b16 %v75
    %v158 = vunpack.c.h.b16 %v75
    %v159 = vunpack.c.l.b16 %v76
    %v160 = vunpack.c.h.b16 %v76
    %v161 = vunpack.c.l.b16 %v77
    %v162 = vunpack.c.h.b16 %v77
    %v163 = vunpack.c.l.b16 %v78
    %v164 = vunpack.c.h.b16 %v78
    %v165 = vunpack.c.l.b16 %v79
    %v166 = vunpack.c.h.b16 %v79
    %v167 = vunpack.c.l.b16 %v80
    %v168 = vunpack.c.h.b16 %v80
    %v169 = vunpack.c.l.b16 %v81
    %v170 = vunpack.c.h.b16 %v81
    %v171 = vunpack.c.l.b16 %v82
    %v172 = vunpack.c.h.b16 %v82
    %v173 = vunpack.c.l.b16 %v83
    %v174 = vunpack.c.h.b16 %v83
    %v175 = vunpack.c.l.b16 %v84
    %v176 = vunpack.c.h.b16 %v84
    %v177 = vunpack.c.l.b16 %v85
    %v178 = vunpack.c.h.b16 %v85
    %v179 = vunpack.c.l.b16 %v86
    %v180 = vunpack.c.h.b16 %v86
    %v181 = vunpack.c.l.b16 %v87
    %v182 = vunpack.c.h.b16 %v87
    %v183 = vunpack.c.l.b16 %v88
    %v184 = vunpack.c.h.b16 %v88
    %v185 = vunpack.c.l.b16 %v89
    %v186 = vunpack.c.h.b16 %v89
    %v187 = vunpack.c.l.b16 %v90
    %v188 = vunpack.c.h.b16 %v90
    %v189 = vunpack.c.l.b16 %v91
    %v190 = vunpack.c.h.b16 %v91
    %v191 = vunpack.c.l.b16 %v92
    %v192 = vunpack.c.h.b16 %v92
    %v193 = vunpack.c.l.b16 %v93
    %v194 = vunpack.c.h.b16 %v93
    %v195 = vunpack.c.l.b16 %v94
    %v196 = vunpack.c.h.b16 %v94
    %v197 = vunpack.c.l.b16 %v95
    %v198 = vunpack.c.h.b16 %v95
    %v199 = vunpack.c.l.b16 %v96
    %v200 = vunpack.c.h.b16 %v96
    %v201 = vunpack.c.l.b16 %v97
    %v202 = vunpack.c.h.b16 %v97
    %v203 = vunpack.c.l.b16 %v98
    %v204 = vunpack.c.h.b16 %v98
    %v205 = vpack.c.b16 %v145, %v141
    %v206 = vpack.c.b16 %v146, %v142
    %v207 = vpack.c.b16 %v147, %v143
    %v208 = vpack.c.b16 %v148, %v144
    %v209 = vpack.c.b16 %v153, %v149
    %v210 = vpack.c.b16 %v154, %v150
    %v211 = vpack.c.b16 %v155, %v151
    %v212 = vpack.c.b16 %v156, %v152
    %v213 = vpack.c.b16 %v161, %v157
    %v214 = vpack.c.b16 %v162, %v158
    %v215 = vpack.c.b16 %v163, %v159
    %v216 = vpack.c.b16 %v164, %v160
    %v217 = vpack.c.b16 %v169, %v165
    %v218 = vpack.c.b16 %v170, %v166
    %v219 = vpack.c.b16 %v171, %v167
    %v220 = vpack.c.b16 %v172, %v168
    %v221 = vpack.c.b16 %v177, %v173
    %v222 = vpack.c.b16 %v178, %v174
    %v223 = vpack.c.b16 %v179, %v175
    %v224 = vpack.c.b16 %v180, %v176
    %v225 = vpack.c.b16 %v185, %v181
    %v226 = vpack.c.b16 %v186, %v182
    %v227 = vpack.c.b16 %v187, %v183
    %v228 = vpack.c.b16 %v188, %v184
    %v229 = vpack.c.b16 %v193, %v189
    %v230 = vpack.c.b16 %v194, %v190
    %v231 = vpack.c.b16 %v195, %v191
    %v232 = vpack.c.b16 %v196, %v192
    %v233 = vpack.c.b16 %v201, %v197
    %v234 = vpack.c.b16 %v202, %v198
    %v235 = vpack.c.b16 %v203, %v199
    %v236 = vpack.c.b16 %v204, %v200
    %269 = vmatpush.bf16.msra.mxu0 %v233
    %270 = vmatpush.bf16.msra.mxu0 %v229
    %271 = vmatpush.bf16.msra.mxu0 %v225
    %272 = vmatpush.bf16.msra.mxu0 %v221
    %273 = vmatpush.bf16.msra.mxu0 %v217
    %274 = vmatpush.bf16.msra.mxu0 %v213
    %275 = vmatpush.bf16.msra.mxu0 %v209
    %276 = vmatpush.bf16.msra.mxu0 %v205
    %277 = vmatmul.bf16.gmra.mxu0 %v66
    %v278 = vpop.f32.mrf.mxu0
    %v279 = vadd.f32 %v101, %v278
    %v280 = vpop.f32.mrf.mxu0
    %281 = vdwg.mxu0
    %282 = vmatpush.bf16.msra.mxu0 %v234
    %283 = vmatpush.bf16.msra.mxu0 %v230
    %284 = vmatpush.bf16.msra.mxu0 %v226
    %285 = vmatpush.bf16.msra.mxu0 %v222
    %286 = vmatpush.bf16.msra.mxu0 %v218
    %287 = vmatpush.bf16.msra.mxu0 %v214
    %288 = vmatpush.bf16.msra.mxu0 %v210
    %289 = vmatpush.bf16.msra.mxu0 %v206
    %290 = vmatmul.bf16.gmra.mxu0 %v66
    %v291 = vpop.f32.mrf.mxu0
    %v292 = vadd.f32 %v102, %v291
    %v293 = vpop.f32.mrf.mxu0
    %294 = vdwg.mxu0
    %295 = vmatpush.bf16.msra.mxu0 %v235
    %296 = vmatpush.bf16.msra.mxu0 %v231
    %297 = vmatpush.bf16.msra.mxu0 %v227
    %298 = vmatpush.bf16.msra.mxu0 %v223
    %299 = vmatpush.bf16.msra.mxu0 %v219
    %300 = vmatpush.bf16.msra.mxu0 %v215
    %301 = vmatpush.bf16.msra.mxu0 %v211
    %302 = vmatpush.bf16.msra.mxu0 %v207
    %303 = vmatmul.bf16.gmra.mxu0 %v66
    %v304 = vpop.f32.mrf.mxu0
    %v305 = vadd.f32 %v103, %v304
    %v306 = vpop.f32.mrf.mxu0
    %307 = vdwg.mxu0
    %308 = vmatpush.bf16.msra.mxu0 %v236
    %309 = vmatpush.bf16.msra.mxu0 %v232
    %310 = vmatpush.bf16.msra.mxu0 %v228
    %311 = vmatpush.bf16.msra.mxu0 %v224
    %312 = vmatpush.bf16.msra.mxu0 %v220
    %313 = vmatpush.bf16.msra.mxu0 %v216
    %314 = vmatpush.bf16.msra.mxu0 %v212
    %315 = vmatpush.bf16.msra.mxu0 %v208
    %316 = vmatmul.bf16.gmra.mxu0 %v66
    %v317 = vpop.f32.mrf.mxu0
    %v318 = vadd.f32 %v104, %v317
    %v319 = vpop.f32.mrf.mxu0
    %320 = vdwg.mxu0
    %v321 = vmax.f32 %v279, 0.0
    %v322 = vmax.f32 %v292, 0.0
    %v323 = vmax.f32 %v305, 0.0
    %v324 = vmax.f32 %v318, 0.0
    %v325 = vpack.c.bf16 %v321, %v321
    %v326 = vpack.c.bf16 %v322, %v322
    %v327 = vpack.c.bf16 %v323, %v323
    %v328 = vpack.c.bf16 %v324, %v324
    %v329 = vld [vmem:[#allocation5] sm:$0xff]
    %v330 = vld [vmem:[#allocation5 + $0x8] sm:$0xff]
    %v331 = vld [vmem:[#allocation5 + $0x10] sm:$0xff]
    %v332 = vld [vmem:[#allocation5 + $0x18] sm:$0xff]
    %v333 = vld [vmem:[#allocation5 + $0x20] sm:$0xff]
    %v334 = vld [vmem:[#allocation5 + $0x28] sm:$0xff]
    %v335 = vld [vmem:[#allocation5 + $0x30] sm:$0xff]
    %v336 = vld [vmem:[#allocation5 + $0x38] sm:$0xff]
    %v337 = vld [vmem:[#allocation5 + $0x40] sm:$0xff]
    %v338 = vld [vmem:[#allocation5 + $0x48] sm:$0xff]
    %v339 = vld [vmem:[#allocation5 + $0x50] sm:$0xff]
    %v340 = vld [vmem:[#allocation5 + $0x58] sm:$0xff]
    %v341 = vld [vmem:[#allocation5 + $0x60] sm:$0xff]
    %v342 = vld [vmem:[#allocation5 + $0x68] sm:$0xff]
    %v343 = vld [vmem:[#allocation5 + $0x70] sm:$0xff]
    %v344 = vld [vmem:[#allocation5 + $0x78] sm:$0xff]
    %v345 = vld [vmem:[#allocation5 + $0x80] sm:$0xff]
    %v346 = vld [vmem:[#allocation5 + $0x88] sm:$0xff]
    %v347 = vld [vmem:[#allocation5 + $0x90] sm:$0xff]
    %v348 = vld [vmem:[#allocation5 + $0x98] sm:$0xff]
    %v349 = vld [vmem:[#allocation5 + $0xa0] sm:$0xff]
    %v350 = vld [vmem:[#allocation5 + $0xa8] sm:$0xff]
    %v351 = vld [vmem:[#allocation5 + $0xb0] sm:$0xff]
    %v352 = vld [vmem:[#allocation5 + $0xb8] sm:$0xff]
    %v353 = vld [vmem:[#allocation5 + $0xc0] sm:$0xff]
    %v354 = vld [vmem:[#allocation5 + $0xc8] sm:$0xff]
    %v355 = vld [vmem:[#allocation5 + $0xd0] sm:$0xff]
    %v356 = vld [vmem:[#allocation5 + $0xd8] sm:$0xff]
    %v357 = vld [vmem:[#allocation5 + $0xe0] sm:$0xff]
    %v358 = vld [vmem:[#allocation5 + $0xe8] sm:$0xff]
    %v359 = vld [vmem:[#allocation5 + $0xf0] sm:$0xff]
    %v360 = vld [vmem:[#allocation5 + $0xf8] sm:$0xff]
    %v361 = vld [vmem:[#allocation5 + $0x100] sm:$0xff]
    %v362 = vld [vmem:[#allocation5 + $0x108] sm:$0xff]
    %v363 = vld [vmem:[#allocation5 + $0x110] sm:$0xff]
    %v364 = vld [vmem:[#allocation5 + $0x118] sm:$0xff]
    %v365 = vld [vmem:[#allocation5 + $0x120] sm:$0xff]
    %v366 = vld [vmem:[#allocation5 + $0x128] sm:$0xff]
    %v367 = vld [vmem:[#allocation5 + $0x130] sm:$0xff]
    %v368 = vld [vmem:[#allocation5 + $0x138] sm:$0xff]
    %v369 = vld [vmem:[#allocation5 + $0x140] sm:$0xff]
    %v370 = vld [vmem:[#allocation5 + $0x148] sm:$0xff]
    %v371 = vld [vmem:[#allocation5 + $0x150] sm:$0xff]
    %v372 = vld [vmem:[#allocation5 + $0x158] sm:$0xff]
    %v373 = vld [vmem:[#allocation5 + $0x160] sm:$0xff]
    %v374 = vld [vmem:[#allocation5 + $0x168] sm:$0xff]
    %v375 = vld [vmem:[#allocation5 + $0x170] sm:$0xff]
    %v376 = vld [vmem:[#allocation5 + $0x178] sm:$0xff]
    %v377 = vld [vmem:[#allocation5 + $0x180] sm:$0xff]
    %v378 = vld [vmem:[#allocation5 + $0x188] sm:$0xff]
    %v379 = vld [vmem:[#allocation5 + $0x190] sm:$0xff]
    %v380 = vld [vmem:[#allocation5 + $0x198] sm:$0xff]
    %v381 = vld [vmem:[#allocation5 + $0x1a0] sm:$0xff]
    %v382 = vld [vmem:[#allocation5 + $0x1a8] sm:$0xff]
    %v383 = vld [vmem:[#allocation5 + $0x1b0] sm:$0xff]
    %v384 = vld [vmem:[#allocation5 + $0x1b8] sm:$0xff]
    %v385 = vld [vmem:[#allocation5 + $0x1c0] sm:$0xff]
    %v386 = vld [vmem:[#allocation5 + $0x1c8] sm:$0xff]
    %v387 = vld [vmem:[#allocation5 + $0x1d0] sm:$0xff]
    %v388 = vld [vmem:[#allocation5 + $0x1d8] sm:$0xff]
    %v389 = vld [vmem:[#allocation5 + $0x1e0] sm:$0xff]
    %v390 = vld [vmem:[#allocation5 + $0x1e8] sm:$0xff]
    %v391 = vld [vmem:[#allocation5 + $0x1f0] sm:$0xff]
    %v392 = vld [vmem:[#allocation5 + $0x1f8] sm:$0xff]
    %v393 = vld [vmem:[%s4] sm:$0x3]
    %v395 = vperm.slane %v393, 0
    %v396 = vperm.slane %v393, 1
    %v463 = vunpack.c.l.b16 %v329
    %v464 = vunpack.c.h.b16 %v329
    %v465 = vunpack.c.l.b16 %v330
    %v466 = vunpack.c.h.b16 %v330
    %v467 = vunpack.c.l.b16 %v331
    %v468 = vunpack.c.h.b16 %v331
    %v469 = vunpack.c.l.b16 %v332
    %v470 = vunpack.c.h.b16 %v332
    %v471 = vunpack.c.l.b16 %v333
    %v472 = vunpack.c.h.b16 %v333
    %v473 = vunpack.c.l.b16 %v334
    %v474 = vunpack.c.h.b16 %v334
    %v475 = vunpack.c.l.b16 %v335
    %v476 = vunpack.c.h.b16 %v335
    %v477 = vunpack.c.l.b16 %v336
    %v478 = vunpack.c.h.b16 %v336
    %v479 = vunpack.c.l.b16 %v337
    %v480 = vunpack.c.h.b16 %v337
    %v481 = vunpack.c.l.b16 %v338
    %v482 = vunpack.c.h.b16 %v338
    %v483 = vunpack.c.l.b16 %v339
    %v484 = vunpack.c.h.b16 %v339
    %v485 = vunpack.c.l.b16 %v340
    %v486 = vunpack.c.h.b16 %v340
    %v487 = vunpack.c.l.b16 %v341
    %v488 = vunpack.c.h.b16 %v341
    %v489 = vunpack.c.l.b16 %v342
    %v490 = vunpack.c.h.b16 %v342
    %v491 = vunpack.c.l.b16 %v343
    %v492 = vunpack.c.h.b16 %v343
    %v493 = vunpack.c.l.b16 %v344
    %v494 = vunpack.c.h.b16 %v344
    %v495 = vunpack.c.l.b16 %v345
    %v496 = vunpack.c.h.b16 %v345
    %v497 = vunpack.c.l.b16 %v346
    %v498 = vunpack.c.h.b16 %v346
    %v499 = vunpack.c.l.b16 %v347
    %v500 = vunpack.c.h.b16 %v347
    %v501 = vunpack.c.l.b16 %v348
    %v502 = vunpack.c.h.b16 %v348
    %v503 = vunpack.c.l.b16 %v349
    %v504 = vunpack.c.h.b16 %v349
    %v505 = vunpack.c.l.b16 %v350
    %v506 = vunpack.c.h.b16 %v350
    %v507 = vunpack.c.l.b16 %v351
    %v508 = vunpack.c.h.b16 %v351
    %v509 = vunpack.c.l.b16 %v352
    %v510 = vunpack.c.h.b16 %v352
    %v511 = vunpack.c.l.b16 %v353
    %v512 = vunpack.c.h.b16 %v353
    %v513 = vunpack.c.l.b16 %v354
    %v514 = vunpack.c.h.b16 %v354
    %v515 = vunpack.c.l.b16 %v355
    %v516 = vunpack.c.h.b16 %v355
    %v517 = vunpack.c.l.b16 %v356
    %v518 = vunpack.c.h.b16 %v356
    %v519 = vunpack.c.l.b16 %v357
    %v520 = vunpack.c.h.b16 %v357
    %v521 = vunpack.c.l.b16 %v358
    %v522 = vunpack.c.h.b16 %v358
    %v523 = vunpack.c.l.b16 %v359
    %v524 = vunpack.c.h.b16 %v359
    %v525 = vunpack.c.l.b16 %v360
    %v526 = vunpack.c.h.b16 %v360
    %v527 = vunpack.c.l.b16 %v361
    %v528 = vunpack.c.h.b16 %v361
    %v529 = vunpack.c.l.b16 %v362
    %v530 = vunpack.c.h.b16 %v362
    %v531 = vunpack.c.l.b16 %v363
    %v532 = vunpack.c.h.b16 %v363
    %v533 = vunpack.c.l.b16 %v364
    %v534 = vunpack.c.h.b16 %v364
    %v535 = vunpack.c.l.b16 %v365
    %v536 = vunpack.c.h.b16 %v365
    %v537 = vunpack.c.l.b16 %v366
    %v538 = vunpack.c.h.b16 %v366
    %v539 = vunpack.c.l.b16 %v367
    %v540 = vunpack.c.h.b16 %v367
    %v541 = vunpack.c.l.b16 %v368
    %v542 = vunpack.c.h.b16 %v368
    %v543 = vunpack.c.l.b16 %v369
    %v544 = vunpack.c.h.b16 %v369
    %v545 = vunpack.c.l.b16 %v370
    %v546 = vunpack.c.h.b16 %v370
    %v547 = vunpack.c.l.b16 %v371
    %v548 = vunpack.c.h.b16 %v371
    %v549 = vunpack.c.l.b16 %v372
    %v550 = vunpack.c.h.b16 %v372
    %v551 = vunpack.c.l.b16 %v373
    %v552 = vunpack.c.h.b16 %v373
    %v553 = vunpack.c.l.b16 %v374
    %v554 = vunpack.c.h.b16 %v374
    %v555 = vunpack.c.l.b16 %v375
    %v556 = vunpack.c.h.b16 %v375
    %v557 = vunpack.c.l.b16 %v376
    %v558 = vunpack.c.h.b16 %v376
    %v559 = vunpack.c.l.b16 %v377
    %v560 = vunpack.c.h.b16 %v377
    %v561 = vunpack.c.l.b16 %v378
    %v562 = vunpack.c.h.b16 %v378
    %v563 = vunpack.c.l.b16 %v379
    %v564 = vunpack.c.h.b16 %v379
    %v565 = vunpack.c.l.b16 %v380
    %v566 = vunpack.c.h.b16 %v380
    %v567 = vunpack.c.l.b16 %v381
    %v568 = vunpack.c.h.b16 %v381
    %v569 = vunpack.c.l.b16 %v382
    %v570 = vunpack.c.h.b16 %v382
    %v571 = vunpack.c.l.b16 %v383
    %v572 = vunpack.c.h.b16 %v383
    %v573 = vunpack.c.l.b16 %v384
    %v574 = vunpack.c.h.b16 %v384
    %v575 = vunpack.c.l.b16 %v385
    %v576 = vunpack.c.h.b16 %v385
    %v577 = vunpack.c.l.b16 %v386
    %v578 = vunpack.c.h.b16 %v386
    %v579 = vunpack.c.l.b16 %v387
    %v580 = vunpack.c.h.b16 %v387
    %v581 = vunpack.c.l.b16 %v388
    %v582 = vunpack.c.h.b16 %v388
    %v583 = vunpack.c.l.b16 %v389
    %v584 = vunpack.c.h.b16 %v389
    %v585 = vunpack.c.l.b16 %v390
    %v586 = vunpack.c.h.b16 %v390
    %v587 = vunpack.c.l.b16 %v391
    %v588 = vunpack.c.h.b16 %v391
    %v589 = vunpack.c.l.b16 %v392
    %v590 = vunpack.c.h.b16 %v392
    %v591 = vpack.c.b16 %v465, %v463
    %v592 = vpack.c.b16 %v466, %v464
    %v593 = vpack.c.b16 %v469, %v467
    %v594 = vpack.c.b16 %v470, %v468
    %v595 = vpack.c.b16 %v473, %v471
    %v596 = vpack.c.b16 %v474, %v472
    %v597 = vpack.c.b16 %v477, %v475
    %v598 = vpack.c.b16 %v478, %v476
    %v599 = vpack.c.b16 %v481, %v479
    %v600 = vpack.c.b16 %v482, %v480
    %v601 = vpack.c.b16 %v485, %v483
    %v602 = vpack.c.b16 %v486, %v484
    %v603 = vpack.c.b16 %v489, %v487
    %v604 = vpack.c.b16 %v490, %v488
    %v605 = vpack.c.b16 %v493, %v491
    %v606 = vpack.c.b16 %v494, %v492
    %v607 = vpack.c.b16 %v497, %v495
    %v608 = vpack.c.b16 %v498, %v496
    %v609 = vpack.c.b16 %v501, %v499
    %v610 = vpack.c.b16 %v502, %v500
    %v611 = vpack.c.b16 %v505, %v503
    %v612 = vpack.c.b16 %v506, %v504
    %v613 = vpack.c.b16 %v509, %v507
    %v614 = vpack.c.b16 %v510, %v508
    %v615 = vpack.c.b16 %v513, %v511
    %v616 = vpack.c.b16 %v514, %v512
    %v617 = vpack.c.b16 %v517, %v515
    %v618 = vpack.c.b16 %v518, %v516
    %v619 = vpack.c.b16 %v521, %v519
    %v620 = vpack.c.b16 %v522, %v520
    %v621 = vpack.c.b16 %v525, %v523
    %v622 = vpack.c.b16 %v526, %v524
    %v623 = vpack.c.b16 %v529, %v527
    %v624 = vpack.c.b16 %v530, %v528
    %v625 = vpack.c.b16 %v533, %v531
    %v626 = vpack.c.b16 %v534, %v532
    %v627 = vpack.c.b16 %v537, %v535
    %v628 = vpack.c.b16 %v538, %v536
    %v629 = vpack.c.b16 %v541, %v539
    %v630 = vpack.c.b16 %v542, %v540
    %v631 = vpack.c.b16 %v545, %v543
    %v632 = vpack.c.b16 %v546, %v544
    %v633 = vpack.c.b16 %v549, %v547
    %v634 = vpack.c.b16 %v550, %v548
    %v635 = vpack.c.b16 %v553, %v551
    %v636 = vpack.c.b16 %v554, %v552
    %v637 = vpack.c.b16 %v557, %v555
    %v638 = vpack.c.b16 %v558, %v556
    %v639 = vpack.c.b16 %v561, %v559
    %v640 = vpack.c.b16 %v562, %v560
    %v641 = vpack.c.b16 %v565, %v563
    %v642 = vpack.c.b16 %v566, %v564
    %v643 = vpack.c.b16 %v569, %v567
    %v644 = vpack.c.b16 %v570, %v568
    %v645 = vpack.c.b16 %v573, %v571
    %v646 = vpack.c.b16 %v574, %v572
    %v647 = vpack.c.b16 %v577, %v575
    %v648 = vpack.c.b16 %v578, %v576
    %v649 = vpack.c.b16 %v581, %v579
    %v650 = vpack.c.b16 %v582, %v580
    %v651 = vpack.c.b16 %v585, %v583
    %v652 = vpack.c.b16 %v586, %v584
    %v653 = vpack.c.b16 %v589, %v587
    %v654 = vpack.c.b16 %v590, %v588
    %719 = vmatpush.bf16.msra.mxu0 %v605
    %720 = vmatpush.bf16.msra.mxu0 %v603
    %721 = vmatpush.bf16.msra.mxu0 %v601
    %722 = vmatpush.bf16.msra.mxu0 %v599
    %723 = vmatpush.bf16.msra.mxu0 %v597
    %724 = vmatpush.bf16.msra.mxu0 %v595
    %725 = vmatpush.bf16.msra.mxu0 %v593
    %726 = vmatpush.bf16.msra.mxu0 %v591
    %727 = vmatmul.bf16.gmra.mxu0 %v325
    %v728 = vpop.f32.mrf.mxu0
    %v729 = vadd.f32 %v395, %v728
    %v730 = vpop.f32.mrf.mxu0
    %731 = vdwg.mxu0
    %732 = vmatpush.bf16.msra.mxu0 %v621
    %733 = vmatpush.bf16.msra.mxu0 %v619
    %734 = vmatpush.bf16.msra.mxu0 %v617
    %735 = vmatpush.bf16.msra.mxu0 %v615
    %736 = vmatpush.bf16.msra.mxu0 %v613
    %737 = vmatpush.bf16.msra.mxu0 %v611
    %738 = vmatpush.bf16.msra.mxu0 %v609
    %739 = vmatpush.bf16.msra.mxu0 %v607
    %740 = vmatmul.bf16.gmra.mxu0 %v326
    %v741 = vpop.f32.mrf.mxu0
    %v742 = vadd.f32 %v729, %v741
    %v743 = vpop.f32.mrf.mxu0
    %744 = vdwg.mxu0
    %745 = vmatpush.bf16.msra.mxu0 %v637
    %746 = vmatpush.bf16.msra.mxu0 %v635
    %747 = vmatpush.bf16.msra.mxu0 %v633
    %748 = vmatpush.bf16.msra.mxu0 %v631
    %749 = vmatpush.bf16.msra.mxu0 %v629
    %750 = vmatpush.bf16.msra.mxu0 %v627
    %751 = vmatpush.bf16.msra.mxu0 %v625
    %752 = vmatpush.bf16.msra.mxu0 %v623
    %753 = vmatmul.bf16.gmra.mxu0 %v327
    %v754 = vpop.f32.mrf.mxu0
    %v755 = vadd.f32 %v742, %v754
    %v756 = vpop.f32.mrf.mxu0
    %757 = vdwg.mxu0
    %758 = vmatpush.bf16.msra.mxu0 %v653
    %759 = vmatpush.bf16.msra.mxu0 %v651
    %760 = vmatpush.bf16.msra.mxu0 %v649
    %761 = vmatpush.bf16.msra.mxu0 %v647
    %762 = vmatpush.bf16.msra.mxu0 %v645
    %763 = vmatpush.bf16.msra.mxu0 %v643
    %764 = vmatpush.bf16.msra.mxu0 %v641
    %765 = vmatpush.bf16.msra.mxu0 %v639
    %766 = vmatmul.bf16.gmra.mxu0 %v328
    %v767 = vpop.f32.mrf.mxu0
    %v768 = vadd.f32 %v755, %v767
    %v769 = vpop.f32.mrf.mxu0
    %770 = vdwg.mxu0
    %771 = vmatpush.bf16.msra.mxu0 %v606
    %772 = vmatpush.bf16.msra.mxu0 %v604
    %773 = vmatpush.bf16.msra.mxu0 %v602
    %774 = vmatpush.bf16.msra.mxu0 %v600
    %775 = vmatpush.bf16.msra.mxu0 %v598
    %776 = vmatpush.bf16.msra.mxu0 %v596
    %777 = vmatpush.bf16.msra.mxu0 %v594
    %778 = vmatpush.bf16.msra.mxu0 %v592
    %779 = vmatmul.bf16.gmra.mxu0 %v325
    %v780 = vpop.f32.mrf.mxu0
    %v781 = vadd.f32 %v396, %v780
    %v782 = vpop.f32.mrf.mxu0
    %783 = vdwg.mxu0
    %784 = vmatpush.bf16.msra.mxu0 %v622
    %785 = vmatpush.bf16.msra.mxu0 %v620
    %786 = vmatpush.bf16.msra.mxu0 %v618
    %787 = vmatpush.bf16.msra.mxu0 %v616
    %788 = vmatpush.bf16.msra.mxu0 %v614
    %789 = vmatpush.bf16.msra.mxu0 %v612
    %790 = vmatpush.bf16.msra.mxu0 %v610
    %791 = vmatpush.bf16.msra.mxu0 %v608
    %792 = vmatmul.bf16.gmra.mxu0 %v326
    %v793 = vpop.f32.mrf.mxu0
    %v794 = vadd.f32 %v781, %v793
    %v795 = vpop.f32.mrf.mxu0
    %796 = vdwg.mxu0
    %797 = vmatpush.bf16.msra.mxu0 %v638
    %798 = vmatpush.bf16.msra.mxu0 %v636
    %799 = vmatpush.bf16.msra.mxu0 %v634
    %800 = vmatpush.bf16.msra.mxu0 %v632
    %801 = vmatpush.bf16.msra.mxu0 %v630
    %802 = vmatpush.bf16.msra.mxu0 %v628
    %803 = vmatpush.bf16.msra.mxu0 %v626
    %804 = vmatpush.bf16.msra.mxu0 %v624
    %805 = vmatmul.bf16.gmra.mxu0 %v327
    %v806 = vpop.f32.mrf.mxu0
    %v807 = vadd.f32 %v794, %v806
    %v808 = vpop.f32.mrf.mxu0
    %809 = vdwg.mxu0
    %810 = vmatpush.bf16.msra.mxu0 %v654
    %811 = vmatpush.bf16.msra.mxu0 %v652
    %812 = vmatpush.bf16.msra.mxu0 %v650
    %813 = vmatpush.bf16.msra.mxu0 %v648
    %814 = vmatpush.bf16.msra.mxu0 %v646
    %815 = vmatpush.bf16.msra.mxu0 %v644
    %816 = vmatpush.bf16.msra.mxu0 %v642
    %817 = vmatpush.bf16.msra.mxu0 %v640
    %818 = vmatmul.bf16.gmra.mxu0 %v328
    %v819 = vpop.f32.mrf.mxu0
    %v820 = vadd.f32 %v807, %v819
    %v821 = vpop.f32.mrf.mxu0
    %822 = vdwg.mxu0
    %v823 = vmax.f32 %v768, 0.0
    %v824 = vmax.f32 %v820, 0.0
    %v825 = vpack.c.bf16 %v823, %v823
    %v826 = vpack.c.bf16 %v824, %v824
    %v827 = vld [vmem:[%s5] sm:$0xf]
    %v828 = vld [vmem:[%s5 + $0x4] sm:$0xf]
    %v829 = vld [vmem:[%s5 + $0x8] sm:$0xf]
    %v830 = vld [vmem:[%s5 + $0xc] sm:$0xf]
    %v831 = vld [vmem:[%s5 + $0x10] sm:$0xf]
    %v832 = vld [vmem:[%s5 + $0x14] sm:$0xf]
    %v833 = vld [vmem:[%s5 + $0x18] sm:$0xf]
    %v834 = vld [vmem:[%s5 + $0x1c] sm:$0xf]
    %v835 = vld [vmem:[%s5 + $0x20] sm:$0xf]
    %v836 = vld [vmem:[%s5 + $0x24] sm:$0xf]
    %v837 = vld [vmem:[%s5 + $0x28] sm:$0xf]
    %v838 = vld [vmem:[%s5 + $0x2c] sm:$0xf]
    %v839 = vld [vmem:[%s5 + $0x30] sm:$0xf]
    %v840 = vld [vmem:[%s5 + $0x34] sm:$0xf]
    %v841 = vld [vmem:[%s5 + $0x38] sm:$0xf]
    %v842 = vld [vmem:[%s5 + $0x3c] sm:$0xf]
    %v843 = vld [vmem:[%s5 + $0x40] sm:$0xf]
    %v844 = vld [vmem:[%s5 + $0x44] sm:$0xf]
    %v845 = vld [vmem:[%s5 + $0x48] sm:$0xf]
    %v846 = vld [vmem:[%s5 + $0x4c] sm:$0xf]
    %v847 = vld [vmem:[%s5 + $0x50] sm:$0xf]
    %v848 = vld [vmem:[%s5 + $0x54] sm:$0xf]
    %v849 = vld [vmem:[%s5 + $0x58] sm:$0xf]
    %v850 = vld [vmem:[%s5 + $0x5c] sm:$0xf]
    %v851 = vld [vmem:[%s5 + $0x60] sm:$0xf]
    %v852 = vld [vmem:[%s5 + $0x64] sm:$0xf]
    %v853 = vld [vmem:[%s5 + $0x68] sm:$0xf]
    %v854 = vld [vmem:[%s5 + $0x6c] sm:$0xf]
    %v855 = vld [vmem:[%s5 + $0x70] sm:$0xf]
    %v856 = vld [vmem:[%s5 + $0x74] sm:$0xf]
    %v857 = vld [vmem:[%s5 + $0x78] sm:$0xf]
    %v858 = vld [vmem:[%s5 + $0x7c] sm:$0xf]
    %v859 = vld [vmem:[%s6] sm:$0x1]
    %v861 = vperm.slane %v859, 0
    %v895 = vunpack.c.l.b16 %v827
    %v896 = vunpack.c.l.b16 %v828
    %v897 = vunpack.c.l.b16 %v829
    %v898 = vunpack.c.l.b16 %v830
    %v899 = vunpack.c.l.b16 %v831
    %v900 = vunpack.c.l.b16 %v832
    %v901 = vunpack.c.l.b16 %v833
    %v902 = vunpack.c.l.b16 %v834
    %v903 = vunpack.c.l.b16 %v835
    %v904 = vunpack.c.l.b16 %v836
    %v905 = vunpack.c.l.b16 %v837
    %v906 = vunpack.c.l.b16 %v838
    %v907 = vunpack.c.l.b16 %v839
    %v908 = vunpack.c.l.b16 %v840
    %v909 = vunpack.c.l.b16 %v841
    %v910 = vunpack.c.l.b16 %v842
    %v911 = vunpack.c.l.b16 %v843
    %v912 = vunpack.c.l.b16 %v844
    %v913 = vunpack.c.l.b16 %v845
    %v914 = vunpack.c.l.b16 %v846
    %v915 = vunpack.c.l.b16 %v847
    %v916 = vunpack.c.l.b16 %v848
    %v917 = vunpack.c.l.b16 %v849
    %v918 = vunpack.c.l.b16 %v850
    %v919 = vunpack.c.l.b16 %v851
    %v920 = vunpack.c.l.b16 %v852
    %v921 = vunpack.c.l.b16 %v853
    %v922 = vunpack.c.l.b16 %v854
    %v923 = vunpack.c.l.b16 %v855
    %v924 = vunpack.c.l.b16 %v856
    %v925 = vunpack.c.l.b16 %v857
    %v926 = vunpack.c.l.b16 %v858
    %v927 = vpack.c.b16 %v896, %v895
    %v928 = vpack.c.b16 %v898, %v897
    %v929 = vpack.c.b16 %v900, %v899
    %v930 = vpack.c.b16 %v902, %v901
    %v931 = vpack.c.b16 %v904, %v903
    %v932 = vpack.c.b16 %v906, %v905
    %v933 = vpack.c.b16 %v908, %v907
    %v934 = vpack.c.b16 %v910, %v909
    %v935 = vpack.c.b16 %v912, %v911
    %v936 = vpack.c.b16 %v914, %v913
    %v937 = vpack.c.b16 %v916, %v915
    %v938 = vpack.c.b16 %v918, %v917
    %v939 = vpack.c.b16 %v920, %v919
    %v940 = vpack.c.b16 %v922, %v921
    %v941 = vpack.c.b16 %v924, %v923
    %v942 = vpack.c.b16 %v926, %v925
    %959 = vmatpush.bf16.msra.mxu0 %v934
    %960 = vmatpush.bf16.msra.mxu0 %v933
    %961 = vmatpush.bf16.msra.mxu0 %v932
    %962 = vmatpush.bf16.msra.mxu0 %v931
    %963 = vmatpush.bf16.msra.mxu0 %v930
    %964 = vmatpush.bf16.msra.mxu0 %v929
    %965 = vmatpush.bf16.msra.mxu0 %v928
    %966 = vmatpush.bf16.msra.mxu0 %v927
    %967 = vmatmul.bf16.gmra.mxu0 %v825
    %v968 = vpop.f32.mrf.mxu0
    %v969 = vadd.f32 %v861, %v968
    %v970 = vpop.f32.mrf.mxu0
    %971 = vdwg.mxu0
    %972 = vmatpush.bf16.msra.mxu0 %v942
    %973 = vmatpush.bf16.msra.mxu0 %v941
    %974 = vmatpush.bf16.msra.mxu0 %v940
    %975 = vmatpush.bf16.msra.mxu0 %v939
    %976 = vmatpush.bf16.msra.mxu0 %v938
    %977 = vmatpush.bf16.msra.mxu0 %v937
    %978 = vmatpush.bf16.msra.mxu0 %v936
    %979 = vmatpush.bf16.msra.mxu0 %v935
    %980 = vmatmul.bf16.gmra.mxu0 %v826
    %v981 = vpop.f32.mrf.mxu0
    %v982 = vadd.f32 %v969, %v981
    %v983 = vpop.f32.mrf.mxu0
    %984 = vdwg.mxu0
    %v985 = vmax.f32 %v982, 0.0
    %v986 = vpack.c.bf16 %v985, %v985
    %v987 = vld [vmem:[%s7] sm:$0xf]
    %v988 = vld [vmem:[%s7 + $0x4] sm:$0xf]
    %v989 = vld [vmem:[%s7 + $0x8] sm:$0xf]
    %v990 = vld [vmem:[%s7 + $0xc] sm:$0xf]
    %v991 = vld [vmem:[%s7 + $0x10] sm:$0xf]
    %v992 = vld [vmem:[%s7 + $0x14] sm:$0xf]
    %v993 = vld [vmem:[%s7 + $0x18] sm:$0xf]
    %v994 = vld [vmem:[%s7 + $0x1c] sm:$0xf]
    %v995 = vld [vmem:[%s8] sm:$0x1]
    %v997 = vperm.slane %v995, 0
    %v1007 = vunpack.c.l.b16 %v987
    %v1008 = vunpack.c.l.b16 %v988
    %v1009 = vunpack.c.l.b16 %v989
    %v1010 = vunpack.c.l.b16 %v990
    %v1011 = vunpack.c.l.b16 %v991
    %v1012 = vunpack.c.l.b16 %v992
    %v1013 = vunpack.c.l.b16 %v993
    %v1014 = vunpack.c.l.b16 %v994
    %v1015 = vpack.c.b16 %v1008, %v1007
    %v1016 = vpack.c.b16 %v1010, %v1009
    %v1017 = vpack.c.b16 %v1012, %v1011
    %v1018 = vpack.c.b16 %v1014, %v1013
    %vm1023 = vcmask 523264
    %v1025 = vsel %vm1023, %v986, 0
    %1027 = vmatpush.bf16.msra.mxu0 0
    %1028 = vmatpush.bf16.msra.mxu0 0
    %1029 = vmatpush.bf16.msra.mxu0 0
    %1030 = vmatpush.bf16.msra.mxu0 0
    %1031 = vmatpush.bf16.msra.mxu0 %v1018
    %1032 = vmatpush.bf16.msra.mxu0 %v1017
    %1033 = vmatpush.bf16.msra.mxu0 %v1016
    %1034 = vmatpush.bf16.msra.mxu0 %v1015
    %1035 = vmatmul.bf16.gmra.mxu0 %v1025
    %v1036 = vpop.f32.mrf.mxu0
    %v1037 = vadd.f32 %v997, %v1036
    %v1038 = vpop.f32.mrf.mxu0
    %1039 = vdwg.mxu0
    %vm1040 = vcmask 80896
    %v1041 = vsel %vm1040, %v1037, -inf
    %1042 = vmax.xlane.f32.xlu0 %v1041
    %v1043 = vpop.xlane.xlu0 %1042
    %v1044 = vsub.f32 %v1037, %v1043
    %v1045 = vmul.f32 %v1044, 1.442695
    %v1046 = vpow.pop %v1045
    %v1047 = vsel %vm1040, %v1046, 0.0
    %1048 = vadd.xlane.f32.xlu0 %v1047
    %v1049 = vpop.xlane.xlu0 %1048
    %v1050 = vrcp.pop %v1049
    %v1051 = vmul.f32 %v1046, %v1050
    %1052 = vst.msk [vmem:[#allocation7] sm:$0xff] %vm1040, %v1051
    // Predicated region
    $region46: #{tpu_custom_call.1} parent=1 // pred_check
      _
    $region47: #{tpu_custom_call.1} parent=1 // pred_check_branch
      %1054 = sbr.rel (0) target = $region49
    $region48: #{tpu_custom_call.1} parent=1 // pred_region
      %1056 = vsyncadd [#allocation4], 0
      %s1058 = sshll.u32 [#allocation7], 4
      %s1059 = int_to_ptr.vmem [resolvable:$true] %s1058
      %s1060 = sshll.u32 %s9, 4
      %s1061 = int_to_ptr.hbm [resolvable:$true] %s1060
      %1063 = dma.vmem_to_hbm [thread:$0]  %s1059, 128, %s1061, [#allocation4]
    $region49: #{tpu_custom_call.1} parent=1 // pred_fallthru
      _
    // Predicated region
    $region50: #{tpu_custom_call.1} parent=1 // pred_check
      _
    $region51: #{tpu_custom_call.1} parent=1 // pred_check_branch
      %1065 = sbr.rel (0) target = $region53
    $region52: #{tpu_custom_call.1} parent=1 // pred_region
      %1067 = dma.done [#allocation4], 128
    $region53: #{tpu_custom_call.1} parent=1 // pred_fallthru
      _
    %1068 = vsyncpa [#allocation3], 1
    %1069 = vsyncpa [#allocation6], 1
    %1070 = vsyncpa [#allocation4], 1

// kernel: tpu_custom_call.1
$region0: #{tpu_custom_call.1}
  #allocation0 [shape = 'u32[]', space=smem, size = 0x4, offset = 0x4, fixed_abs, tag = 'smem constant byte address 0x4 - core index']
  #allocation1 [shape = 'u32[72,128]{1,0:T(1,128)}', space=vmem, size = 0x9000, scoped, tag = 'internal scratch']
  %s0 = inlined_call_operand.vmem [shape: bf16[8,128], index: 0, kind: input, shape index: {}]
  %s1 = inlined_call_operand.hbm [shape: bf16[128,512], index: 1, kind: input, shape index: {}]
  %s2 = inlined_call_operand.vmem [shape: f32[1,512], index: 2, kind: input, shape index: {}]
  %s3 = inlined_call_operand.hbm [shape: bf16[512,256], index: 3, kind: input, shape index: {}]
  %s4 = inlined_call_operand.vmem [shape: f32[1,256], index: 4, kind: input, shape index: {}]
  %s5 = inlined_call_operand.vmem [shape: bf16[256,64], index: 5, kind: input, shape index: {}]
  %s6 = inlined_call_operand.vmem [shape: f32[1,64], index: 6, kind: input, shape index: {}]
  %s7 = inlined_call_operand.vmem [shape: bf16[64,10], index: 7, kind: input, shape index: {}]
  %s8 = inlined_call_operand.vmem [shape: f32[1,10], index: 8, kind: input, shape index: {}]
  %s9 = inlined_call_operand.hbm [shape: f32[8,10], index: 9, kind: output, shape index: {}]
  %s10 = sld [smem:[#allocation0]]
  $region54: #{tpu_custom_call.1} parent=0
    _
  %s12 = ssub.s32 1, %s10
  %s13 = scalar_select 0, %s12, %s10
  $region1: #{tpu_custom_call.1} parent=0
    #allocation2 [shape = 'u8[131072]{0}', space=vmem, size = 0x20000, scoped, tag = 'input window, operand 1, single buffered']
    #allocation3 [shape = 's32[1]{0}', space=sflag, size = 0x4, scoped, tag = 'scoped memory for tpu_custom_call.1']
    #allocation4 [shape = 's32[1]{0}', space=sflag, size = 0x4, scoped, tag = 'scoped memory for tpu_custom_call.1']
    #allocation5 [shape = 'u8[262144]{0}', space=vmem, size = 0x40000, scoped, tag = 'input window, operand 3, single buffered']
    #allocation6 [shape = 's32[1]{0}', space=sflag, size = 0x4, scoped, tag = 'scoped memory for tpu_custom_call.1']
    #allocation7 [shape = 'u8[4096]{0}', space=vmem, size = 0x1000, scoped, tag = 'output window, operand 0, single buffered']
    %14 = vsyncpa [#allocation3], 0
    %15 = vsyncpa [#allocation6], 0
    %16 = vsyncpa [#allocation4], 0
    // Predicated region
    $region2: #{tpu_custom_call.1} parent=1 // pred_check
      _
    $region3: #{tpu_custom_call.1} parent=1 // pred_check_branch
      %18 = sbr.rel (0) target = $region5
    $region4: #{tpu_custom_call.1} parent=1 // pred_region
      _
    $region5: #{tpu_custom_call.1} parent=1 // pred_fallthru
      _
    // Predicated region
    $region6: #{tpu_custom_call.1} parent=1 // pred_check
      _
    $region7: #{tpu_custom_call.1} parent=1 // pred_check_branch
      %20 = sbr.rel (0) target = $region9
    $region8: #{tpu_custom_call.1} parent=1 // pred_region
      %22 = vsyncadd [#allocation3], 0
      %s23 = sshll.u32 %s1, 4
      %s24 = int_to_ptr.hbm [resolvable:$true] %s23
      %s25 = sshll.u32 [#allocation2], 4
      %s26 = int_to_ptr.vmem [resolvable:$true] %s25
      %31 = dma.hbm_to_vmem [thread:$0]  %s24, 4096, %s26, [#allocation3], 256, 256, 16
    $region9: #{tpu_custom_call.1} parent=1 // pred_fallthru
      _
    // Predicated region
    $region10: #{tpu_custom_call.1} parent=1 // pred_check
      _
    $region11: #{tpu_custom_call.1} parent=1 // pred_check_branch
      %33 = sbr.rel (0) target = $region13
    $region12: #{tpu_custom_call.1} parent=1 // pred_region
      _
    $region13: #{tpu_custom_call.1} parent=1 // pred_fallthru
      _
    // Predicated region
    $region14: #{tpu_custom_call.1} parent=1 // pred_check
      _
    $region15: #{tpu_custom_call.1} parent=1 // pred_check_branch
      %35 = sbr.rel (0) target = $region17
    $region16: #{tpu_custom_call.1} parent=1 // pred_region
      %37 = vsyncadd [#allocation6], 0
      %s38 = sshll.u32 %s3, 4
      %s39 = int_to_ptr.hbm [resolvable:$true] %s38
      %s40 = sshll.u32 [#allocation5], 4
      %s41 = int_to_ptr.vmem [resolvable:$true] %s40
      %46 = dma.hbm_to_vmem [thread:$0]  %s39, 8192, %s41, [#allocation6], 128, 128, 8
    $region17: #{tpu_custom_call.1} parent=1 // pred_fallthru
      _
    // Predicated region
    $region18: #{tpu_custom_call.1} parent=1 // pred_check
      _
    $region19: #{tpu_custom_call.1} parent=1 // pred_check_branch
      %48 = sbr.rel (0) target = $region21
    $region20: #{tpu_custom_call.1} parent=1 // pred_region
      _
    $region21: #{tpu_custom_call.1} parent=1 // pred_fallthru
      _
    // Predicated region
    $region22: #{tpu_custom_call.1} parent=1 // pred_check
      _
    $region23: #{tpu_custom_call.1} parent=1 // pred_check_branch
      %50 = sbr.rel (0) target = $region25
    $region24: #{tpu_custom_call.1} parent=1 // pred_region
      _
    $region25: #{tpu_custom_call.1} parent=1 // pred_fallthru
      _
    // Predicated region
    $region26: #{tpu_custom_call.1} parent=1 // pred_check
      _
    $region27: #{tpu_custom_call.1} parent=1 // pred_check_branch
      %52 = sbr.rel (0) target = $region29
    $region28: #{tpu_custom_call.1} parent=1 // pred_region
      _
    $region29: #{tpu_custom_call.1} parent=1 // pred_fallthru
      _
    // Predicated region
    $region30: #{tpu_custom_call.1} parent=1 // pred_check
      _
    $region31: #{tpu_custom_call.1} parent=1 // pred_check_branch
      %54 = sbr.rel (0) target = $region33
    $region32: #{tpu_custom_call.1} parent=1 // pred_region
      _
    $region33: #{tpu_custom_call.1} parent=1 // pred_fallthru
      _
    // Predicated region
    $region34: #{tpu_custom_call.1} parent=1 // pred_check
      _
    $region35: #{tpu_custom_call.1} parent=1 // pred_check_branch
      %56 = sbr.rel (0) target = $region37
    $region36: #{tpu_custom_call.1} parent=1 // pred_region
      _
    $region37: #{tpu_custom_call.1} parent=1 // pred_fallthru
      _
    // Predicated region
    $region38: #{tpu_custom_call.1} parent=1 // pred_check
      _
    $region39: #{tpu_custom_call.1} parent=1 // pred_check_branch
      %58 = sbr.rel (0) target = $region41
    $region40: #{tpu_custom_call.1} parent=1 // pred_region
      %60 = dma.done [#allocation3], 4096
    $region41: #{tpu_custom_call.1} parent=1 // pred_fallthru
      _
    // Predicated region
    $region42: #{tpu_custom_call.1} parent=1 // pred_check
      _
    $region43: #{tpu_custom_call.1} parent=1 // pred_check_branch
      %62 = sbr.rel (0) target = $region45
    $region44: #{tpu_custom_call.1} parent=1 // pred_region
      %64 = dma.done [#allocation6], 8192
    $region45: #{tpu_custom_call.1} parent=1 // pred_fallthru
      _
    %v66 = vld [vmem:[%s0] sm:$0xf]
    %v67 = vld [vmem:[#allocation2] sm:$0xff]
    %v68 = vld [vmem:[#allocation2 + $0x8] sm:$0xff]
    %v69 = vld [vmem:[#allocation2 + $0x10] sm:$0xff]
    %v70 = vld [vmem:[#allocation2 + $0x18] sm:$0xff]
    %v71 = vld [vmem:[#allocation2 + $0x20] sm:$0xff]
    %v72 = vld [vmem:[#allocation2 + $0x28] sm:$0xff]
    %v73 = vld [vmem:[#allocation2 + $0x30] sm:$0xff]
    %v74 = vld [vmem:[#allocation2 + $0x38] sm:$0xff]
    %v75 = vld [vmem:[#allocation2 + $0x40] sm:$0xff]
    %v76 = vld [vmem:[#allocation2 + $0x48] sm:$0xff]
    %v77 = vld [vmem:[#allocation2 + $0x50] sm:$0xff]
    %v78 = vld [vmem:[#allocation2 + $0x58] sm:$0xff]
    %v79 = vld [vmem:[#allocation2 + $0x60] sm:$0xff]
    %v80 = vld [vmem:[#allocation2 + $0x68] sm:$0xff]
    %v81 = vld [vmem:[#allocation2 + $0x70] sm:$0xff]
    %v82 = vld [vmem:[#allocation2 + $0x78] sm:$0xff]
    %v83 = vld [vmem:[#allocation2 + $0x80] sm:$0xff]
    %v84 = vld [vmem:[#allocation2 + $0x88] sm:$0xff]
    %v85 = vld [vmem:[#allocation2 + $0x90] sm:$0xff]
    %v86 = vld [vmem:[#allocation2 + $0x98] sm:$0xff]
    %v87 = vld [vmem:[#allocation2 + $0xa0] sm:$0xff]
    %v88 = vld [vmem:[#allocation2 + $0xa8] sm:$0xff]
    %v89 = vld [vmem:[#allocation2 + $0xb0] sm:$0xff]
    %v90 = vld [vmem:[#allocation2 + $0xb8] sm:$0xff]
    %v91 = vld [vmem:[#allocation2 + $0xc0] sm:$0xff]
    %v92 = vld [vmem:[#allocation2 + $0xc8] sm:$0xff]
    %v93 = vld [vmem:[#allocation2 + $0xd0] sm:$0xff]
    %v94 = vld [vmem:[#allocation2 + $0xd8] sm:$0xff]
    %v95 = vld [vmem:[#allocation2 + $0xe0] sm:$0xff]
    %v96 = vld [vmem:[#allocation2 + $0xe8] sm:$0xff]
    %v97 = vld [vmem:[#allocation2 + $0xf0] sm:$0xff]
    %v98 = vld [vmem:[#allocation2 + $0xf8] sm:$0xff]
    %v99 = vld [vmem:[%s2] sm:$0xf]
    %v101 = vperm.slane %v99, 0
    %v102 = vperm.slane %v99, 1
    %v103 = vperm.slane %v99, 2
    %v104 = vperm.slane %v99, 3
    %v141 = vunpack.c.l.b16 %v67
    %v142 = vunpack.c.h.b16 %v67
    %v143 = vunpack.c.l.b16 %v68
    %v144 = vunpack.c.h.b16 %v68
    %v145 = vunpack.c.l.b16 %v69
    %v146 = vunpack.c.h.b16 %v69
    %v147 = vunpack.c.l.b16 %v70
    %v148 = vunpack.c.h.b16 %v70
    %v149 = vunpack.c.l.b16 %v71
    %v150 = vunpack.c.h.b16 %v71
    %v151 = vunpack.c.l.b16 %v72
    %v152 = vunpack.c.h.b16 %v72
    %v153 = vunpack.c.l.b16 %v73
    %v154 = vunpack.c.h.b16 %v73
    %v155 = vunpack.c.l.b16 %v74
    %v156 = vunpack.c.h.b16 %v74
    %v157 = vunpack.c.l.b16 %v75
    %v158 = vunpack.c.h.b16 %v75
    %v159 = vunpack.c.l.b16 %v76
    %v160 = vunpack.c.h.b16 %v76
    %v161 = vunpack.c.l.b16 %v77
    %v162 = vunpack.c.h.b16 %v77
    %v163 = vunpack.c.l.b16 %v78
    %v164 = vunpack.c.h.b16 %v78
    %v165 = vunpack.c.l.b16 %v79
    %v166 = vunpack.c.h.b16 %v79
    %v167 = vunpack.c.l.b16 %v80
    %v168 = vunpack.c.h.b16 %v80
    %v169 = vunpack.c.l.b16 %v81
    %v170 = vunpack.c.h.b16 %v81
    %v171 = vunpack.c.l.b16 %v82
    %v172 = vunpack.c.h.b16 %v82
    %v173 = vunpack.c.l.b16 %v83
    %v174 = vunpack.c.h.b16 %v83
    %v175 = vunpack.c.l.b16 %v84
    %v176 = vunpack.c.h.b16 %v84
    %v177 = vunpack.c.l.b16 %v85
    %v178 = vunpack.c.h.b16 %v85
    %v179 = vunpack.c.l.b16 %v86
    %v180 = vunpack.c.h.b16 %v86
    %v181 = vunpack.c.l.b16 %v87
    %v182 = vunpack.c.h.b16 %v87
    %v183 = vunpack.c.l.b16 %v88
    %v184 = vunpack.c.h.b16 %v88
    %v185 = vunpack.c.l.b16 %v89
    %v186 = vunpack.c.h.b16 %v89
    %v187 = vunpack.c.l.b16 %v90
    %v188 = vunpack.c.h.b16 %v90
    %v189 = vunpack.c.l.b16 %v91
    %v190 = vunpack.c.h.b16 %v91
    %v191 = vunpack.c.l.b16 %v92
    %v192 = vunpack.c.h.b16 %v92
    %v193 = vunpack.c.l.b16 %v93
    %v194 = vunpack.c.h.b16 %v93
    %v195 = vunpack.c.l.b16 %v94
    %v196 = vunpack.c.h.b16 %v94
    %v197 = vunpack.c.l.b16 %v95
    %v198 = vunpack.c.h.b16 %v95
    %v199 = vunpack.c.l.b16 %v96
    %v200 = vunpack.c.h.b16 %v96
    %v201 = vunpack.c.l.b16 %v97
    %v202 = vunpack.c.h.b16 %v97
    %v203 = vunpack.c.l.b16 %v98
    %v204 = vunpack.c.h.b16 %v98
    %v205 = vpack.c.b16 %v145, %v141
    %v206 = vpack.c.b16 %v146, %v142
    %v207 = vpack.c.b16 %v147, %v143
    %v208 = vpack.c.b16 %v148, %v144
    %v209 = vpack.c.b16 %v153, %v149
    %v210 = vpack.c.b16 %v154, %v150
    %v211 = vpack.c.b16 %v155, %v151
    %v212 = vpack.c.b16 %v156, %v152
    %v213 = vpack.c.b16 %v161, %v157
    %v214 = vpack.c.b16 %v162, %v158
    %v215 = vpack.c.b16 %v163, %v159
    %v216 = vpack.c.b16 %v164, %v160
    %v217 = vpack.c.b16 %v169, %v165
    %v218 = vpack.c.b16 %v170, %v166
    %v219 = vpack.c.b16 %v171, %v167
    %v220 = vpack.c.b16 %v172, %v168
    %v221 = vpack.c.b16 %v177, %v173
    %v222 = vpack.c.b16 %v178, %v174
    %v223 = vpack.c.b16 %v179, %v175
    %v224 = vpack.c.b16 %v180, %v176
    %v225 = vpack.c.b16 %v185, %v181
    %v226 = vpack.c.b16 %v186, %v182
    %v227 = vpack.c.b16 %v187, %v183
    %v228 = vpack.c.b16 %v188, %v184
    %v229 = vpack.c.b16 %v193, %v189
    %v230 = vpack.c.b16 %v194, %v190
    %v231 = vpack.c.b16 %v195, %v191
    %v232 = vpack.c.b16 %v196, %v192
    %v233 = vpack.c.b16 %v201, %v197
    %v234 = vpack.c.b16 %v202, %v198
    %v235 = vpack.c.b16 %v203, %v199
    %v236 = vpack.c.b16 %v204, %v200
    %269 = vmatpush.bf16.msra.mxu0 %v233
    %270 = vmatpush.bf16.msra.mxu0 %v229
    %271 = vmatpush.bf16.msra.mxu0 %v225
    %272 = vmatpush.bf16.msra.mxu0 %v221
    %273 = vmatpush.bf16.msra.mxu0 %v217
    %274 = vmatpush.bf16.msra.mxu0 %v213
    %275 = vmatpush.bf16.msra.mxu0 %v209
    %276 = vmatpush.bf16.msra.mxu0 %v205
    %277 = vmatmul.bf16.gmra.mxu0 %v66
    %v278 = vpop.f32.mrf.mxu0
    %v279 = vadd.f32 %v101, %v278
    %v280 = vpop.f32.mrf.mxu0
    %281 = vdwg.mxu0
    %282 = vmatpush.bf16.msra.mxu0 %v234
    %283 = vmatpush.bf16.msra.mxu0 %v230
    %284 = vmatpush.bf16.msra.mxu0 %v226
    %285 = vmatpush.bf16.msra.mxu0 %v222
    %286 = vmatpush.bf16.msra.mxu0 %v218
    %287 = vmatpush.bf16.msra.mxu0 %v214
    %288 = vmatpush.bf16.msra.mxu0 %v210
    %289 = vmatpush.bf16.msra.mxu0 %v206
    %290 = vmatmul.bf16.gmra.mxu0 %v66
    %v291 = vpop.f32.mrf.mxu0
    %v292 = vadd.f32 %v102, %v291
    %v293 = vpop.f32.mrf.mxu0
    %294 = vdwg.mxu0
    %295 = vmatpush.bf16.msra.mxu0 %v235
    %296 = vmatpush.bf16.msra.mxu0 %v231
    %297 = vmatpush.bf16.msra.mxu0 %v227
    %298 = vmatpush.bf16.msra.mxu0 %v223
    %299 = vmatpush.bf16.msra.mxu0 %v219
    %300 = vmatpush.bf16.msra.mxu0 %v215
    %301 = vmatpush.bf16.msra.mxu0 %v211
    %302 = vmatpush.bf16.msra.mxu0 %v207
    %303 = vmatmul.bf16.gmra.mxu0 %v66
    %v304 = vpop.f32.mrf.mxu0
    %v305 = vadd.f32 %v103, %v304
    %v306 = vpop.f32.mrf.mxu0
    %307 = vdwg.mxu0
    %308 = vmatpush.bf16.msra.mxu0 %v236
    %309 = vmatpush.bf16.msra.mxu0 %v232
    %310 = vmatpush.bf16.msra.mxu0 %v228
    %311 = vmatpush.bf16.msra.mxu0 %v224
    %312 = vmatpush.bf16.msra.mxu0 %v220
    %313 = vmatpush.bf16.msra.mxu0 %v216
    %314 = vmatpush.bf16.msra.mxu0 %v212
    %315 = vmatpush.bf16.msra.mxu0 %v208
    %316 = vmatmul.bf16.gmra.mxu0 %v66
    %v317 = vpop.f32.mrf.mxu0
    %v318 = vadd.f32 %v104, %v317
    %v319 = vpop.f32.mrf.mxu0
    %320 = vdwg.mxu0
    %v321 = vmax.f32 %v279, 0.0
    %v322 = vmax.f32 %v292, 0.0
    %v323 = vmax.f32 %v305, 0.0
    %v324 = vmax.f32 %v318, 0.0
    %v325 = vpack.c.bf16 %v321, %v321
    %v326 = vpack.c.bf16 %v322, %v322
    %v327 = vpack.c.bf16 %v323, %v323
    %v328 = vpack.c.bf16 %v324, %v324
    %v329 = vld [vmem:[#allocation5] sm:$0xff]
    %v330 = vld [vmem:[#allocation5 + $0x8] sm:$0xff]
    %v331 = vld [vmem:[#allocation5 + $0x10] sm:$0xff]
    %v332 = vld [vmem:[#allocation5 + $0x18] sm:$0xff]
    %v333 = vld [vmem:[#allocation5 + $0x20] sm:$0xff]
    %v334 = vld [vmem:[#allocation5 + $0x28] sm:$0xff]
    %v335 = vld [vmem:[#allocation5 + $0x30] sm:$0xff]
    %v336 = vld [vmem:[#allocation5 + $0x38] sm:$0xff]
    %v337 = vld [vmem:[#allocation5 + $0x40] sm:$0xff]
    %v338 = vld [vmem:[#allocation5 + $0x48] sm:$0xff]
    %v339 = vld [vmem:[#allocation5 + $0x50] sm:$0xff]
    %v340 = vld [vmem:[#allocation5 + $0x58] sm:$0xff]
    %v341 = vld [vmem:[#allocation5 + $0x60] sm:$0xff]
    %v342 = vld [vmem:[#allocation5 + $0x68] sm:$0xff]
    %v343 = vld [vmem:[#allocation5 + $0x70] sm:$0xff]
    %v344 = vld [vmem:[#allocation5 + $0x78] sm:$0xff]
    %v345 = vld [vmem:[#allocation5 + $0x80] sm:$0xff]
    %v346 = vld [vmem:[#allocation5 + $0x88] sm:$0xff]
    %v347 = vld [vmem:[#allocation5 + $0x90] sm:$0xff]
    %v348 = vld [vmem:[#allocation5 + $0x98] sm:$0xff]
    %v349 = vld [vmem:[#allocation5 + $0xa0] sm:$0xff]
    %v350 = vld [vmem:[#allocation5 + $0xa8] sm:$0xff]
    %v351 = vld [vmem:[#allocation5 + $0xb0] sm:$0xff]
    %v352 = vld [vmem:[#allocation5 + $0xb8] sm:$0xff]
    %v353 = vld [vmem:[#allocation5 + $0xc0] sm:$0xff]
    %v354 = vld [vmem:[#allocation5 + $0xc8] sm:$0xff]
    %v355 = vld [vmem:[#allocation5 + $0xd0] sm:$0xff]
    %v356 = vld [vmem:[#allocation5 + $0xd8] sm:$0xff]
    %v357 = vld [vmem:[#allocation5 + $0xe0] sm:$0xff]
    %v358 = vld [vmem:[#allocation5 + $0xe8] sm:$0xff]
    %v359 = vld [vmem:[#allocation5 + $0xf0] sm:$0xff]
    %v360 = vld [vmem:[#allocation5 + $0xf8] sm:$0xff]
    %v361 = vld [vmem:[#allocation5 + $0x100] sm:$0xff]
    %v362 = vld [vmem:[#allocation5 + $0x108] sm:$0xff]
    %v363 = vld [vmem:[#allocation5 + $0x110] sm:$0xff]
    %v364 = vld [vmem:[#allocation5 + $0x118] sm:$0xff]
    %v365 = vld [vmem:[#allocation5 + $0x120] sm:$0xff]
    %v366 = vld [vmem:[#allocation5 + $0x128] sm:$0xff]
    %v367 = vld [vmem:[#allocation5 + $0x130] sm:$0xff]
    %v368 = vld [vmem:[#allocation5 + $0x138] sm:$0xff]
    %v369 = vld [vmem:[#allocation5 + $0x140] sm:$0xff]
    %v370 = vld [vmem:[#allocation5 + $0x148] sm:$0xff]
    %v371 = vld [vmem:[#allocation5 + $0x150] sm:$0xff]
    %v372 = vld [vmem:[#allocation5 + $0x158] sm:$0xff]
    %v373 = vld [vmem:[#allocation5 + $0x160] sm:$0xff]
    %v374 = vld [vmem:[#allocation5 + $0x168] sm:$0xff]
    %v375 = vld [vmem:[#allocation5 + $0x170] sm:$0xff]
    %v376 = vld [vmem:[#allocation5 + $0x178] sm:$0xff]
    %v377 = vld [vmem:[#allocation5 + $0x180] sm:$0xff]
    %v378 = vld [vmem:[#allocation5 + $0x188] sm:$0xff]
    %v379 = vld [vmem:[#allocation5 + $0x190] sm:$0xff]
    %v380 = vld [vmem:[#allocation5 + $0x198] sm:$0xff]
    %v381 = vld [vmem:[#allocation5 + $0x1a0] sm:$0xff]
    %v382 = vld [vmem:[#allocation5 + $0x1a8] sm:$0xff]
    %v383 = vld [vmem:[#allocation5 + $0x1b0] sm:$0xff]
    %v384 = vld [vmem:[#allocation5 + $0x1b8] sm:$0xff]
    %v385 = vld [vmem:[#allocation5 + $0x1c0] sm:$0xff]
    %v386 = vld [vmem:[#allocation5 + $0x1c8] sm:$0xff]
    %v387 = vld [vmem:[#allocation5 + $0x1d0] sm:$0xff]
    %v388 = vld [vmem:[#allocation5 + $0x1d8] sm:$0xff]
    %v389 = vld [vmem:[#allocation5 + $0x1e0] sm:$0xff]
    %v390 = vld [vmem:[#allocation5 + $0x1e8] sm:$0xff]
    %v391 = vld [vmem:[#allocation5 + $0x1f0] sm:$0xff]
    %v392 = vld [vmem:[#allocation5 + $0x1f8] sm:$0xff]
    %v393 = vld [vmem:[%s4] sm:$0x3]
    %v395 = vperm.slane %v393, 0
    %v396 = vperm.slane %v393, 1
    %v463 = vunpack.c.l.b16 %v329
    %v464 = vunpack.c.h.b16 %v329
    %v465 = vunpack.c.l.b16 %v330
    %v466 = vunpack.c.h.b16 %v330
    %v467 = vunpack.c.l.b16 %v331
    %v468 = vunpack.c.h.b16 %v331
    %v469 = vunpack.c.l.b16 %v332
    %v470 = vunpack.c.h.b16 %v332
    %v471 = vunpack.c.l.b16 %v333
    %v472 = vunpack.c.h.b16 %v333
    %v473 = vunpack.c.l.b16 %v334
    %v474 = vunpack.c.h.b16 %v334
    %v475 = vunpack.c.l.b16 %v335
    %v476 = vunpack.c.h.b16 %v335
    %v477 = vunpack.c.l.b16 %v336
    %v478 = vunpack.c.h.b16 %v336
    %v479 = vunpack.c.l.b16 %v337
    %v480 = vunpack.c.h.b16 %v337
    %v481 = vunpack.c.l.b16 %v338
    %v482 = vunpack.c.h.b16 %v338
    %v483 = vunpack.c.l.b16 %v339
    %v484 = vunpack.c.h.b16 %v339
    %v485 = vunpack.c.l.b16 %v340
    %v486 = vunpack.c.h.b16 %v340
    %v487 = vunpack.c.l.b16 %v341
    %v488 = vunpack.c.h.b16 %v341
    %v489 = vunpack.c.l.b16 %v342
    %v490 = vunpack.c.h.b16 %v342
    %v491 = vunpack.c.l.b16 %v343
    %v492 = vunpack.c.h.b16 %v343
    %v493 = vunpack.c.l.b16 %v344
    %v494 = vunpack.c.h.b16 %v344
    %v495 = vunpack.c.l.b16 %v345
    %v496 = vunpack.c.h.b16 %v345
    %v497 = vunpack.c.l.b16 %v346
    %v498 = vunpack.c.h.b16 %v346
    %v499 = vunpack.c.l.b16 %v347
    %v500 = vunpack.c.h.b16 %v347
    %v501 = vunpack.c.l.b16 %v348
    %v502 = vunpack.c.h.b16 %v348
    %v503 = vunpack.c.l.b16 %v349
    %v504 = vunpack.c.h.b16 %v349
    %v505 = vunpack.c.l.b16 %v350
    %v506 = vunpack.c.h.b16 %v350
    %v507 = vunpack.c.l.b16 %v351
    %v508 = vunpack.c.h.b16 %v351
    %v509 = vunpack.c.l.b16 %v352
    %v510 = vunpack.c.h.b16 %v352
    %v511 = vunpack.c.l.b16 %v353
    %v512 = vunpack.c.h.b16 %v353
    %v513 = vunpack.c.l.b16 %v354
    %v514 = vunpack.c.h.b16 %v354
    %v515 = vunpack.c.l.b16 %v355
    %v516 = vunpack.c.h.b16 %v355
    %v517 = vunpack.c.l.b16 %v356
    %v518 = vunpack.c.h.b16 %v356
    %v519 = vunpack.c.l.b16 %v357
    %v520 = vunpack.c.h.b16 %v357
    %v521 = vunpack.c.l.b16 %v358
    %v522 = vunpack.c.h.b16 %v358
    %v523 = vunpack.c.l.b16 %v359
    %v524 = vunpack.c.h.b16 %v359
    %v525 = vunpack.c.l.b16 %v360
    %v526 = vunpack.c.h.b16 %v360
    %v527 = vunpack.c.l.b16 %v361
    %v528 = vunpack.c.h.b16 %v361
    %v529 = vunpack.c.l.b16 %v362
    %v530 = vunpack.c.h.b16 %v362
    %v531 = vunpack.c.l.b16 %v363
    %v532 = vunpack.c.h.b16 %v363
    %v533 = vunpack.c.l.b16 %v364
    %v534 = vunpack.c.h.b16 %v364
    %v535 = vunpack.c.l.b16 %v365
    %v536 = vunpack.c.h.b16 %v365
    %v537 = vunpack.c.l.b16 %v366
    %v538 = vunpack.c.h.b16 %v366
    %v539 = vunpack.c.l.b16 %v367
    %v540 = vunpack.c.h.b16 %v367
    %v541 = vunpack.c.l.b16 %v368
    %v542 = vunpack.c.h.b16 %v368
    %v543 = vunpack.c.l.b16 %v369
    %v544 = vunpack.c.h.b16 %v369
    %v545 = vunpack.c.l.b16 %v370
    %v546 = vunpack.c.h.b16 %v370
    %v547 = vunpack.c.l.b16 %v371
    %v548 = vunpack.c.h.b16 %v371
    %v549 = vunpack.c.l.b16 %v372
    %v550 = vunpack.c.h.b16 %v372
    %v551 = vunpack.c.l.b16 %v373
    %v552 = vunpack.c.h.b16 %v373
    %v553 = vunpack.c.l.b16 %v374
    %v554 = vunpack.c.h.b16 %v374
    %v555 = vunpack.c.l.b16 %v375
    %v556 = vunpack.c.h.b16 %v375
    %v557 = vunpack.c.l.b16 %v376
    %v558 = vunpack.c.h.b16 %v376
    %v559 = vunpack.c.l.b16 %v377
    %v560 = vunpack.c.h.b16 %v377
    %v561 = vunpack.c.l.b16 %v378
    %v562 = vunpack.c.h.b16 %v378
    %v563 = vunpack.c.l.b16 %v379
    %v564 = vunpack.c.h.b16 %v379
    %v565 = vunpack.c.l.b16 %v380
    %v566 = vunpack.c.h.b16 %v380
    %v567 = vunpack.c.l.b16 %v381
    %v568 = vunpack.c.h.b16 %v381
    %v569 = vunpack.c.l.b16 %v382
    %v570 = vunpack.c.h.b16 %v382
    %v571 = vunpack.c.l.b16 %v383
    %v572 = vunpack.c.h.b16 %v383
    %v573 = vunpack.c.l.b16 %v384
    %v574 = vunpack.c.h.b16 %v384
    %v575 = vunpack.c.l.b16 %v385
    %v576 = vunpack.c.h.b16 %v385
    %v577 = vunpack.c.l.b16 %v386
    %v578 = vunpack.c.h.b16 %v386
    %v579 = vunpack.c.l.b16 %v387
    %v580 = vunpack.c.h.b16 %v387
    %v581 = vunpack.c.l.b16 %v388
    %v582 = vunpack.c.h.b16 %v388
    %v583 = vunpack.c.l.b16 %v389
    %v584 = vunpack.c.h.b16 %v389
    %v585 = vunpack.c.l.b16 %v390
    %v586 = vunpack.c.h.b16 %v390
    %v587 = vunpack.c.l.b16 %v391
    %v588 = vunpack.c.h.b16 %v391
    %v589 = vunpack.c.l.b16 %v392
    %v590 = vunpack.c.h.b16 %v392
    %v591 = vpack.c.b16 %v465, %v463
    %v592 = vpack.c.b16 %v466, %v464
    %v593 = vpack.c.b16 %v469, %v467
    %v594 = vpack.c.b16 %v470, %v468
    %v595 = vpack.c.b16 %v473, %v471
    %v596 = vpack.c.b16 %v474, %v472
    %v597 = vpack.c.b16 %v477, %v475
    %v598 = vpack.c.b16 %v478, %v476
    %v599 = vpack.c.b16 %v481, %v479
    %v600 = vpack.c.b16 %v482, %v480
    %v601 = vpack.c.b16 %v485, %v483
    %v602 = vpack.c.b16 %v486, %v484
    %v603 = vpack.c.b16 %v489, %v487
    %v604 = vpack.c.b16 %v490, %v488
    %v605 = vpack.c.b16 %v493, %v491
    %v606 = vpack.c.b16 %v494, %v492
    %v607 = vpack.c.b16 %v497, %v495
    %v608 = vpack.c.b16 %v498, %v496
    %v609 = vpack.c.b16 %v501, %v499
    %v610 = vpack.c.b16 %v502, %v500
    %v611 = vpack.c.b16 %v505, %v503
    %v612 = vpack.c.b16 %v506, %v504
    %v613 = vpack.c.b16 %v509, %v507
    %v614 = vpack.c.b16 %v510, %v508
    %v615 = vpack.c.b16 %v513, %v511
    %v616 = vpack.c.b16 %v514, %v512
    %v617 = vpack.c.b16 %v517, %v515
    %v618 = vpack.c.b16 %v518, %v516
    %v619 = vpack.c.b16 %v521, %v519
    %v620 = vpack.c.b16 %v522, %v520
    %v621 = vpack.c.b16 %v525, %v523
    %v622 = vpack.c.b16 %v526, %v524
    %v623 = vpack.c.b16 %v529, %v527
    %v624 = vpack.c.b16 %v530, %v528
    %v625 = vpack.c.b16 %v533, %v531
    %v626 = vpack.c.b16 %v534, %v532
    %v627 = vpack.c.b16 %v537, %v535
    %v628 = vpack.c.b16 %v538, %v536
    %v629 = vpack.c.b16 %v541, %v539
    %v630 = vpack.c.b16 %v542, %v540
    %v631 = vpack.c.b16 %v545, %v543
    %v632 = vpack.c.b16 %v546, %v544
    %v633 = vpack.c.b16 %v549, %v547
    %v634 = vpack.c.b16 %v550, %v548
    %v635 = vpack.c.b16 %v553, %v551
    %v636 = vpack.c.b16 %v554, %v552
    %v637 = vpack.c.b16 %v557, %v555
    %v638 = vpack.c.b16 %v558, %v556
    %v639 = vpack.c.b16 %v561, %v559
    %v640 = vpack.c.b16 %v562, %v560
    %v641 = vpack.c.b16 %v565, %v563
    %v642 = vpack.c.b16 %v566, %v564
    %v643 = vpack.c.b16 %v569, %v567
    %v644 = vpack.c.b16 %v570, %v568
    %v645 = vpack.c.b16 %v573, %v571
    %v646 = vpack.c.b16 %v574, %v572
    %v647 = vpack.c.b16 %v577, %v575
    %v648 = vpack.c.b16 %v578, %v576
    %v649 = vpack.c.b16 %v581, %v579
    %v650 = vpack.c.b16 %v582, %v580
    %v651 = vpack.c.b16 %v585, %v583
    %v652 = vpack.c.b16 %v586, %v584
    %v653 = vpack.c.b16 %v589, %v587
    %v654 = vpack.c.b16 %v590, %v588
    %719 = vmatpush.bf16.msra.mxu0 %v605
    %720 = vmatpush.bf16.msra.mxu0 %v603
    %721 = vmatpush.bf16.msra.mxu0 %v601
    %722 = vmatpush.bf16.msra.mxu0 %v599
    %723 = vmatpush.bf16.msra.mxu0 %v597
    %724 = vmatpush.bf16.msra.mxu0 %v595
    %725 = vmatpush.bf16.msra.mxu0 %v593
    %726 = vmatpush.bf16.msra.mxu0 %v591
    %727 = vmatmul.bf16.gmra.mxu0 %v325
    %v728 = vpop.f32.mrf.mxu0
    %v729 = vadd.f32 %v395, %v728
    %v730 = vpop.f32.mrf.mxu0
    %731 = vdwg.mxu0
    %732 = vmatpush.bf16.msra.mxu0 %v621
    %733 = vmatpush.bf16.msra.mxu0 %v619
    %734 = vmatpush.bf16.msra.mxu0 %v617
    %735 = vmatpush.bf16.msra.mxu0 %v615
    %736 = vmatpush.bf16.msra.mxu0 %v613
    %737 = vmatpush.bf16.msra.mxu0 %v611
    %738 = vmatpush.bf16.msra.mxu0 %v609
    %739 = vmatpush.bf16.msra.mxu0 %v607
    %740 = vmatmul.bf16.gmra.mxu0 %v326
    %v741 = vpop.f32.mrf.mxu0
    %v742 = vadd.f32 %v729, %v741
    %v743 = vpop.f32.mrf.mxu0
    %744 = vdwg.mxu0
    %745 = vmatpush.bf16.msra.mxu0 %v637
    %746 = vmatpush.bf16.msra.mxu0 %v635
    %747 = vmatpush.bf16.msra.mxu0 %v633
    %748 = vmatpush.bf16.msra.mxu0 %v631
    %749 = vmatpush.bf16.msra.mxu0 %v629
    %750 = vmatpush.bf16.msra.mxu0 %v627
    %751 = vmatpush.bf16.msra.mxu0 %v625
    %752 = vmatpush.bf16.msra.mxu0 %v623
    %753 = vmatmul.bf16.gmra.mxu0 %v327
    %v754 = vpop.f32.mrf.mxu0
    %v755 = vadd.f32 %v742, %v754
    %v756 = vpop.f32.mrf.mxu0
    %757 = vdwg.mxu0
    %758 = vmatpush.bf16.msra.mxu0 %v653
    %759 = vmatpush.bf16.msra.mxu0 %v651
    %760 = vmatpush.bf16.msra.mxu0 %v649
    %761 = vmatpush.bf16.msra.mxu0 %v647
    %762 = vmatpush.bf16.msra.mxu0 %v645
    %763 = vmatpush.bf16.msra.mxu0 %v643
    %764 = vmatpush.bf16.msra.mxu0 %v641
    %765 = vmatpush.bf16.msra.mxu0 %v639
    %766 = vmatmul.bf16.gmra.mxu0 %v328
    %v767 = vpop.f32.mrf.mxu0
    %v768 = vadd.f32 %v755, %v767
    %v769 = vpop.f32.mrf.mxu0
    %770 = vdwg.mxu0
    %771 = vmatpush.bf16.msra.mxu0 %v606
    %772 = vmatpush.bf16.msra.mxu0 %v604
    %773 = vmatpush.bf16.msra.mxu0 %v602
    %774 = vmatpush.bf16.msra.mxu0 %v600
    %775 = vmatpush.bf16.msra.mxu0 %v598
    %776 = vmatpush.bf16.msra.mxu0 %v596
    %777 = vmatpush.bf16.msra.mxu0 %v594
    %778 = vmatpush.bf16.msra.mxu0 %v592
    %779 = vmatmul.bf16.gmra.mxu0 %v325
    %v780 = vpop.f32.mrf.mxu0
    %v781 = vadd.f32 %v396, %v780
    %v782 = vpop.f32.mrf.mxu0
    %783 = vdwg.mxu0
    %784 = vmatpush.bf16.msra.mxu0 %v622
    %785 = vmatpush.bf16.msra.mxu0 %v620
    %786 = vmatpush.bf16.msra.mxu0 %v618
    %787 = vmatpush.bf16.msra.mxu0 %v616
    %788 = vmatpush.bf16.msra.mxu0 %v614
    %789 = vmatpush.bf16.msra.mxu0 %v612
    %790 = vmatpush.bf16.msra.mxu0 %v610
    %791 = vmatpush.bf16.msra.mxu0 %v608
    %792 = vmatmul.bf16.gmra.mxu0 %v326
    %v793 = vpop.f32.mrf.mxu0
    %v794 = vadd.f32 %v781, %v793
    %v795 = vpop.f32.mrf.mxu0
    %796 = vdwg.mxu0
    %797 = vmatpush.bf16.msra.mxu0 %v638
    %798 = vmatpush.bf16.msra.mxu0 %v636
    %799 = vmatpush.bf16.msra.mxu0 %v634
    %800 = vmatpush.bf16.msra.mxu0 %v632
    %801 = vmatpush.bf16.msra.mxu0 %v630
    %802 = vmatpush.bf16.msra.mxu0 %v628
    %803 = vmatpush.bf16.msra.mxu0 %v626
    %804 = vmatpush.bf16.msra.mxu0 %v624
    %805 = vmatmul.bf16.gmra.mxu0 %v327
    %v806 = vpop.f32.mrf.mxu0
    %v807 = vadd.f32 %v794, %v806
    %v808 = vpop.f32.mrf.mxu0
    %809 = vdwg.mxu0
    %810 = vmatpush.bf16.msra.mxu0 %v654
    %811 = vmatpush.bf16.msra.mxu0 %v652
    %812 = vmatpush.bf16.msra.mxu0 %v650
    %813 = vmatpush.bf16.msra.mxu0 %v648
    %814 = vmatpush.bf16.msra.mxu0 %v646
    %815 = vmatpush.bf16.msra.mxu0 %v644
    %816 = vmatpush.bf16.msra.mxu0 %v642
    %817 = vmatpush.bf16.msra.mxu0 %v640
    %818 = vmatmul.bf16.gmra.mxu0 %v328
    %v819 = vpop.f32.mrf.mxu0
    %v820 = vadd.f32 %v807, %v819
    %v821 = vpop.f32.mrf.mxu0
    %822 = vdwg.mxu0
    %v823 = vmax.f32 %v768, 0.0
    %v824 = vmax.f32 %v820, 0.0
    %v825 = vpack.c.bf16 %v823, %v823
    %v826 = vpack.c.bf16 %v824, %v824
    %v827 = vld [vmem:[%s5] sm:$0xf]
    %v828 = vld [vmem:[%s5 + $0x4] sm:$0xf]
    %v829 = vld [vmem:[%s5 + $0x8] sm:$0xf]
    %v830 = vld [vmem:[%s5 + $0xc] sm:$0xf]
    %v831 = vld [vmem:[%s5 + $0x10] sm:$0xf]
    %v832 = vld [vmem:[%s5 + $0x14] sm:$0xf]
    %v833 = vld [vmem:[%s5 + $0x18] sm:$0xf]
    %v834 = vld [vmem:[%s5 + $0x1c] sm:$0xf]
    %v835 = vld [vmem:[%s5 + $0x20] sm:$0xf]
    %v836 = vld [vmem:[%s5 + $0x24] sm:$0xf]
    %v837 = vld [vmem:[%s5 + $0x28] sm:$0xf]
    %v838 = vld [vmem:[%s5 + $0x2c] sm:$0xf]
    %v839 = vld [vmem:[%s5 + $0x30] sm:$0xf]
    %v840 = vld [vmem:[%s5 + $0x34] sm:$0xf]
    %v841 = vld [vmem:[%s5 + $0x38] sm:$0xf]
    %v842 = vld [vmem:[%s5 + $0x3c] sm:$0xf]
    %v843 = vld [vmem:[%s5 + $0x40] sm:$0xf]
    %v844 = vld [vmem:[%s5 + $0x44] sm:$0xf]
    %v845 = vld [vmem:[%s5 + $0x48] sm:$0xf]
    %v846 = vld [vmem:[%s5 + $0x4c] sm:$0xf]
    %v847 = vld [vmem:[%s5 + $0x50] sm:$0xf]
    %v848 = vld [vmem:[%s5 + $0x54] sm:$0xf]
    %v849 = vld [vmem:[%s5 + $0x58] sm:$0xf]
    %v850 = vld [vmem:[%s5 + $0x5c] sm:$0xf]
    %v851 = vld [vmem:[%s5 + $0x60] sm:$0xf]
    %v852 = vld [vmem:[%s5 + $0x64] sm:$0xf]
    %v853 = vld [vmem:[%s5 + $0x68] sm:$0xf]
    %v854 = vld [vmem:[%s5 + $0x6c] sm:$0xf]
    %v855 = vld [vmem:[%s5 + $0x70] sm:$0xf]
    %v856 = vld [vmem:[%s5 + $0x74] sm:$0xf]
    %v857 = vld [vmem:[%s5 + $0x78] sm:$0xf]
    %v858 = vld [vmem:[%s5 + $0x7c] sm:$0xf]
    %v859 = vld [vmem:[%s6] sm:$0x1]
    %v861 = vperm.slane %v859, 0
    %v895 = vunpack.c.l.b16 %v827
    %v896 = vunpack.c.l.b16 %v828
    %v897 = vunpack.c.l.b16 %v829
    %v898 = vunpack.c.l.b16 %v830
    %v899 = vunpack.c.l.b16 %v831
    %v900 = vunpack.c.l.b16 %v832
    %v901 = vunpack.c.l.b16 %v833
    %v902 = vunpack.c.l.b16 %v834
    %v903 = vunpack.c.l.b16 %v835
    %v904 = vunpack.c.l.b16 %v836
    %v905 = vunpack.c.l.b16 %v837
    %v906 = vunpack.c.l.b16 %v838
    %v907 = vunpack.c.l.b16 %v839
    %v908 = vunpack.c.l.b16 %v840
    %v909 = vunpack.c.l.b16 %v841
    %v910 = vunpack.c.l.b16 %v842
    %v911 = vunpack.c.l.b16 %v843
    %v912 = vunpack.c.l.b16 %v844
    %v913 = vunpack.c.l.b16 %v845
    %v914 = vunpack.c.l.b16 %v846
    %v915 = vunpack.c.l.b16 %v847
    %v916 = vunpack.c.l.b16 %v848
    %v917 = vunpack.c.l.b16 %v849
    %v918 = vunpack.c.l.b16 %v850
    %v919 = vunpack.c.l.b16 %v851
    %v920 = vunpack.c.l.b16 %v852
    %v921 = vunpack.c.l.b16 %v853
    %v922 = vunpack.c.l.b16 %v854
    %v923 = vunpack.c.l.b16 %v855
    %v924 = vunpack.c.l.b16 %v856
    %v925 = vunpack.c.l.b16 %v857
    %v926 = vunpack.c.l.b16 %v858
    %v927 = vpack.c.b16 %v896, %v895
    %v928 = vpack.c.b16 %v898, %v897
    %v929 = vpack.c.b16 %v900, %v899
    %v930 = vpack.c.b16 %v902, %v901
    %v931 = vpack.c.b16 %v904, %v903
    %v932 = vpack.c.b16 %v906, %v905
    %v933 = vpack.c.b16 %v908, %v907
    %v934 = vpack.c.b16 %v910, %v909
    %v935 = vpack.c.b16 %v912, %v911
    %v936 = vpack.c.b16 %v914, %v913
    %v937 = vpack.c.b16 %v916, %v915
    %v938 = vpack.c.b16 %v918, %v917
    %v939 = vpack.c.b16 %v920, %v919
    %v940 = vpack.c.b16 %v922, %v921
    %v941 = vpack.c.b16 %v924, %v923
    %v942 = vpack.c.b16 %v926, %v925
    %959 = vmatpush.bf16.msra.mxu0 %v934
    %960 = vmatpush.bf16.msra.mxu0 %v933
    %961 = vmatpush.bf16.msra.mxu0 %v932
    %962 = vmatpush.bf16.msra.mxu0 %v931
    %963 = vmatpush.bf16.msra.mxu0 %v930
    %964 = vmatpush.bf16.msra.mxu0 %v929
    %965 = vmatpush.bf16.msra.mxu0 %v928
    %966 = vmatpush.bf16.msra.mxu0 %v927
    %967 = vmatmul.bf16.gmra.mxu0 %v825
    %v968 = vpop.f32.mrf.mxu0
    %v969 = vadd.f32 %v861, %v968
    %v970 = vpop.f32.mrf.mxu0
    %971 = vdwg.mxu0
    %972 = vmatpush.bf16.msra.mxu0 %v942
    %973 = vmatpush.bf16.msra.mxu0 %v941
    %974 = vmatpush.bf16.msra.mxu0 %v940
    %975 = vmatpush.bf16.msra.mxu0 %v939
    %976 = vmatpush.bf16.msra.mxu0 %v938
    %977 = vmatpush.bf16.msra.mxu0 %v937
    %978 = vmatpush.bf16.msra.mxu0 %v936
    %979 = vmatpush.bf16.msra.mxu0 %v935
    %980 = vmatmul.bf16.gmra.mxu0 %v826
    %v981 = vpop.f32.mrf.mxu0
    %v982 = vadd.f32 %v969, %v981
    %v983 = vpop.f32.mrf.mxu0
    %984 = vdwg.mxu0
    %v985 = vmax.f32 %v982, 0.0
    %v986 = vpack.c.bf16 %v985, %v985
    %v987 = vld [vmem:[%s7] sm:$0xf]
    %v988 = vld [vmem:[%s7 + $0x4] sm:$0xf]
    %v989 = vld [vmem:[%s7 + $0x8] sm:$0xf]
    %v990 = vld [vmem:[%s7 + $0xc] sm:$0xf]
    %v991 = vld [vmem:[%s7 + $0x10] sm:$0xf]
    %v992 = vld [vmem:[%s7 + $0x14] sm:$0xf]
    %v993 = vld [vmem:[%s7 + $0x18] sm:$0xf]
    %v994 = vld [vmem:[%s7 + $0x1c] sm:$0xf]
    %v995 = vld [vmem:[%s8] sm:$0x1]
    %v997 = vperm.slane %v995, 0
    %v1007 = vunpack.c.l.b16 %v987
    %v1008 = vunpack.c.l.b16 %v988
    %v1009 = vunpack.c.l.b16 %v989
    %v1010 = vunpack.c.l.b16 %v990
    %v1011 = vunpack.c.l.b16 %v991
    %v1012 = vunpack.c.l.b16 %v992
    %v1013 = vunpack.c.l.b16 %v993
    %v1014 = vunpack.c.l.b16 %v994
    %v1015 = vpack.c.b16 %v1008, %v1007
    %v1016 = vpack.c.b16 %v1010, %v1009
    %v1017 = vpack.c.b16 %v1012, %v1011
    %v1018 = vpack.c.b16 %v1014, %v1013
    %vm1023 = vcmask 523264
    %v1025 = vsel %vm1023, %v986, 0
    %1027 = vmatpush.bf16.msra.mxu0 0
    %1028 = vmatpush.bf16.msra.mxu0 0
    %1029 = vmatpush.bf16.msra.mxu0 0
    %1030 = vmatpush.bf16.msra.mxu0 0
    %1031 = vmatpush.bf16.msra.mxu0 %v1018
    %1032 = vmatpush.bf16.msra.mxu0 %v1017
    %1033 = vmatpush.bf16.msra.mxu0 %v1016
    %1034 = vmatpush.bf16.msra.mxu0 %v1015
    %1035 = vmatmul.bf16.gmra.mxu0 %v1025
    %v1036 = vpop.f32.mrf.mxu0
    %v1037 = vadd.f32 %v997, %v1036
    %v1038 = vpop.f32.mrf.mxu0
    %1039 = vdwg.mxu0
    %vm1040 = vcmask 80896
    %v1041 = vsel %vm1040, %v1037, -inf
    %1042 = vmax.xlane.f32.xlu0 %v1041
    %v1043 = vpop.xlane.xlu0 %1042
    %v1044 = vsub.f32 %v1037, %v1043
    %v1045 = vmul.f32 %v1044, 1.442695
    %v1046 = vpow.pop %v1045
    %v1047 = vsel %vm1040, %v1046, 0.0
    %1048 = vadd.xlane.f32.xlu0 %v1047
    %v1049 = vpop.xlane.xlu0 %1048
    %v1050 = vrcp.pop %v1049
    %v1051 = vmul.f32 %v1046, %v1050
    %1052 = vst.msk [vmem:[#allocation7] sm:$0xff] %vm1040, %v1051
    // Predicated region
    $region46: #{tpu_custom_call.1} parent=1 // pred_check
      _
    $region47: #{tpu_custom_call.1} parent=1 // pred_check_branch
      %1054 = sbr.rel (0) target = $region49
    $region48: #{tpu_custom_call.1} parent=1 // pred_region
      %1056 = vsyncadd [#allocation4], 0
      %s1058 = sshll.u32 [#allocation7], 4
      %s1059 = int_to_ptr.vmem [resolvable:$true] %s1058
      %s1060 = sshll.u32 %s9, 4
      %s1061 = int_to_ptr.hbm [resolvable:$true] %s1060
      %1063 = dma.vmem_to_hbm [thread:$0]  %s1059, 128, %s1061, [#allocation4]
    $region49: #{tpu_custom_call.1} parent=1 // pred_fallthru
      _
    // Predicated region
    $region50: #{tpu_custom_call.1} parent=1 // pred_check
      _
    $region51: #{tpu_custom_call.1} parent=1 // pred_check_branch
      %1065 = sbr.rel (0) target = $region53
    $region52: #{tpu_custom_call.1} parent=1 // pred_region
      %1067 = dma.done [#allocation4], 128
    $region53: #{tpu_custom_call.1} parent=1 // pred_fallthru
      _
    %1068 = vsyncpa [#allocation3], 1
    %1069 = vsyncpa [#allocation6], 1
    %1070 = vsyncpa [#allocation4], 1

</llo_original>
